<compile_context>
chip_gen: v7x
topology: tpu7x:2x2x1
jax: 0.10.0
libtpu: 0.0.40
codegen_flags: <defaults>
</compile_context>

<pallas_src>
import functools

import jax
import jax.numpy as jnp
import numpy as np
from jax.experimental import pallas as pl
from jax.experimental.pallas import tpu as pltpu

EPS = 1e-5


def _basic_block_kernel(x_ref, w1_ref, g1_ref, b1_ref, w2_ref, g2_ref, b2_ref,
                        o_ref, ap_ref, xcol_ref, *, H, W):
    """Whole BasicBlock, single invocation, VMEM-resident.

    x_ref    : (N, C, H*W)            input, channels in sublanes, pixels in lanes
    w*_ref   : (C_out, 9*C_in)        im2col-folded conv weights
    g*/b*    : (1, C, 1)              batchnorm gamma / beta
    o_ref    : (N, C, H*W)            output
    ap_ref   : (N, C, H*W + 2*(W+1))  lane-padded staging buffer (halo = W+1)
    xcol_ref : (N, 9*C, H*W)          im2col matrix
    """
    N, C, P = x_ref.shape
    PAD = W + 1
    TAPS = [(dy, dx) for dy in (-1, 0, 1) for dx in (-1, 0, 1)]

    # Column index of every flattened pixel (lane iota) -> masks for the
    # dx = +/-1 taps that would otherwise wrap across row ends.
    col = jax.lax.broadcasted_iota(jnp.int32, (1, 1, P), 2) % W
    ok_left = col >= 1           # reading (i, j-1) is valid
    ok_right = col <= W - 2      # reading (i, j+1) is valid

    # Zero ONLY the halo strips of the staging buffer (once, reused by both convs).
    zhalo = jnp.zeros((N, C, PAD), jnp.float32)
    ap_ref[:, :, 0:PAD] = zhalo
    ap_ref[:, :, PAD + P:2 * PAD + P] = zhalo

    def conv3x3(a, w_ref):
        # a: (N, C, P) float32 value.  Returns (N, C, P) float32.
        ap_ref[:, :, PAD:PAD + P] = a
        for t, (dy, dx) in enumerate(TAPS):
            d = dy * W + dx
            s = ap_ref[:, :, PAD + d:PAD + d + P]     # a shifted by d, zero-filled halo
            if dx == -1:
                s = jnp.where(ok_left, s, 0.0)
            elif dx == 1:
                s = jnp.where(ok_right, s, 0.0)
            xcol_ref[:, t * C:(t + 1) * C, :] = s
        w = w_ref[...]                                 # (C_out, 9*C_in)
        outs = [jnp.dot(w, xcol_ref[n], preferred_element_type=jnp.float32)
                for n in range(N)]                     # one MXU matmul per image
        return jnp.stack(outs, axis=0)                 # (N, C, P)

    def bn(y, g_ref, b_ref):
        # Single-pass training-mode BN: sum & sum-of-squares while y is in vregs.
        cnt = jnp.float32(N * P)
        s1 = jnp.sum(jnp.sum(y, axis=2, keepdims=True), axis=0, keepdims=True)
        s2 = jnp.sum(jnp.sum(y * y, axis=2, keepdims=True), axis=0, keepdims=True)
        mean = s1 / cnt
        var = s2 / cnt - mean * mean                   # biased variance
        scale = g_ref[...] * jax.lax.rsqrt(var + EPS)  # (1, C, 1)
        shift = b_ref[...] - mean * scale
        return y * scale + shift

    x = x_ref[...]                                      # identity branch (single input)

    h1 = jnp.maximum(bn(conv3x3(x, w1_ref), g1_ref, b1_ref), 0.0)
    h2 = bn(conv3x3(h1, w2_ref), g2_ref, b2_ref)
    o_ref[...] = jnp.maximum(h2 + x, 0.0)


@jax.jit
def basic_block(x_nchw, w1, g1, b1, w2, g2, b2):
    """x_nchw: (N, C, H, W) float32; conv weights in HWIO (3,3,C,C); returns NCHW."""
    N, C, H, W = x_nchw.shape
    P = H * W

    # Reshapes only — no transposes, no padding, no duplicated identity input.
    x = x_nchw.reshape(N, C, P).astype(jnp.float32)

    def to_wmat(w):   # (3,3,Cin,Cout) -> (Cout, 9*Cin), k = (ky*3+kx)*Cin + ci
        return jnp.transpose(w.reshape(9 * C, C)).astype(jnp.float32)

    def to_cvec(v):
        return v.reshape(1, C, 1).astype(jnp.float32)

    kernel = functools.partial(_basic_block_kernel, H=H, W=W)
    out = pl.pallas_call(
        kernel,
        out_shape=jax.ShapeDtypeStruct((N, C, P), jnp.float32),
        scratch_shapes=[
            pltpu.VMEM((N, C, P + 2 * (W + 1)), jnp.float32),  # lane-padded staging
            pltpu.VMEM((N, 9 * C, P), jnp.float32),            # im2col matrix
        ],
    )(x, to_wmat(w1), to_cvec(g1), to_cvec(b1),
      to_wmat(w2), to_cvec(g2), to_cvec(b2))

    return out.reshape(N, C, H, W)


@jax.jit
def _reference(x, w1, g1, b1, w2, g2, b2):
    """Pure-JAX (XLA conv) reference in NCHW for the correctness check."""
    def conv(y, w):
        return jax.lax.conv_general_dilated(
            y, w, window_strides=(1, 1), padding="SAME",
            dimension_numbers=("NCHW", "HWIO", "NCHW"))

    def bn(y, g, b):
        m = jnp.mean(y, axis=(0, 2, 3), keepdims=True)
        v = jnp.mean((y - m) ** 2, axis=(0, 2, 3), keepdims=True)
        return (y - m) / jnp.sqrt(v + EPS) * g.reshape(1, -1, 1, 1) + b.reshape(1, -1, 1, 1)

    h = jax.nn.relu(bn(conv(x, w1), g1, b1))
    return jax.nn.relu(bn(conv(h, w2), g2, b2) + x)


if __name__ == "__main__":
    # BasicBlock(inplanes=4, planes=4, stride=1, downsample=None)
    N, C, H, W = 2, 4, 16, 16

    key = jax.random.PRNGKey(0)
    kx, k1, k2, kg1, kb1, kg2, kb2 = jax.random.split(key, 7)

    x = jax.random.normal(kx, (N, C, H, W), dtype=jnp.float32)
    # conv weights in HWIO layout: (3, 3, C_in, C_out), bias=False
    w1 = 0.1 * jax.random.normal(k1, (3, 3, C, C), dtype=jnp.float32)
    w2 = 0.1 * jax.random.normal(k2, (3, 3, C, C), dtype=jnp.float32)
    # batchnorm affine params
    g1 = 1.0 + 0.1 * jax.random.normal(kg1, (C,), dtype=jnp.float32)
    b1 = 0.1 * jax.random.normal(kb1, (C,), dtype=jnp.float32)
    g2 = 1.0 + 0.1 * jax.random.normal(kg2, (C,), dtype=jnp.float32)
    b2 = 0.1 * jax.random.normal(kb2, (C,), dtype=jnp.float32)

    out = jax.block_until_ready(basic_block(x, w1, g1, b1, w2, g2, b2))
    ref = jax.block_until_ready(_reference(x, w1, g1, b1, w2, g2, b2))
    np.testing.assert_allclose(np.asarray(out), np.asarray(ref),
                               rtol=5e-4, atol=5e-4)

    print("KERNEL_OK")
</pallas_src>

<mosaic_0001>
module attributes {stable_mosaic.version = 11 : i64} {
  func.func @_basic_block_kernel(%arg0: memref<2x4x256xf32, #tpu.memory_space<vmem>>, %arg1: memref<4x36xf32, #tpu.memory_space<vmem>>, %arg2: memref<1x4x1xf32, #tpu.memory_space<vmem>>, %arg3: memref<1x4x1xf32, #tpu.memory_space<vmem>>, %arg4: memref<4x36xf32, #tpu.memory_space<vmem>>, %arg5: memref<1x4x1xf32, #tpu.memory_space<vmem>>, %arg6: memref<1x4x1xf32, #tpu.memory_space<vmem>>, %arg7: memref<2x4x256xf32, #tpu.memory_space<vmem>>, %arg8: memref<2x4x290xf32, #tpu.memory_space<vmem>>, %arg9: memref<2x36x256xf32, #tpu.memory_space<vmem>>) attributes {dimension_semantics = [], scalar_prefetch = 0 : i64, scratch_operands = 2 : i64, tpu.core_type = #tpu.core_type<tc>} {
    %0 = tpu.iota {dimensions = array<i32: 2>} : vector<1x1x256xi32>
    %c16_i32 = arith.constant 16 : i32
    %c0_i32 = arith.constant 0 : i32
    %1 = arith.cmpi eq, %c16_i32, %c0_i32 : i32
    %c1_i32 = arith.constant 1 : i32
    %2 = arith.select %1, %c1_i32, %c16_i32 : i32
    %3 = vector.broadcast %2 : i32 to vector<1x1x256xi32>
    %4 = arith.remsi %0, %3 : vector<1x1x256xi32>
    %c0_i32_0 = arith.constant 0 : i32
    %5 = vector.broadcast %c0_i32_0 : i32 to vector<1x1x256xi32>
    %6 = arith.cmpi ne, %4, %5 : vector<1x1x256xi32>
    %c0_i32_1 = arith.constant 0 : i32
    %7 = vector.broadcast %c0_i32_1 : i32 to vector<1x1x256xi32>
    %8 = arith.cmpi slt, %4, %7 : vector<1x1x256xi32>
    %c0_i32_2 = arith.constant 0 : i32
    %9 = arith.cmpi slt, %2, %c0_i32_2 : i32
    %10 = vector.broadcast %9 : i1 to vector<1x1x256xi1>
    %11 = vector.broadcast %10 : vector<1x1x256xi1> to vector<1x1x256xi1>
    %12 = arith.xori %8, %11 : vector<1x1x256xi1>
    %13 = arith.andi %12, %6 : vector<1x1x256xi1>
    %14 = vector.broadcast %2 : i32 to vector<1x1x256xi32>
    %15 = arith.addi %4, %14 : vector<1x1x256xi32>
    %16 = arith.select %13, %15, %4 : vector<1x1x256xi1>, vector<1x1x256xi32>
    %c1_i32_3 = arith.constant 1 : i32
    %17 = vector.broadcast %c1_i32_3 : i32 to vector<1x1x256xi32>
    %18 = arith.cmpi sge, %16, %17 : vector<1x1x256xi32>
    %c14_i32 = arith.constant 14 : i32
    %19 = vector.broadcast %c14_i32 : i32 to vector<1x1x256xi32>
    %20 = arith.cmpi sle, %16, %19 : vector<1x1x256xi32>
    %cst = arith.constant 0.000000e+00 : f32
    %21 = vector.broadcast %cst : f32 to vector<2x4x17xf32>
    %c0 = arith.constant 0 : index
    %c0_4 = arith.constant 0 : index
    %c0_5 = arith.constant 0 : index
    %22 = vector.load %arg8[%c0, %c0_4, %c0_5] : memref<2x4x290xf32, #tpu.memory_space<vmem>>, vector<2x4x17xf32>
    tpu.vector_store %arg8[%c0, %c0_4, %c0_5], %21 {strides = array<i32>} : memref<2x4x290xf32, #tpu.memory_space<vmem>>, vector<2x4x17xf32>,
    %c0_6 = arith.constant 0 : index
    %c0_7 = arith.constant 0 : index
    %c273 = arith.constant 273 : index
    %23 = vector.load %arg8[%c0_6, %c0_7, %c273] : memref<2x4x290xf32, #tpu.memory_space<vmem>>, vector<2x4x17xf32>
    tpu.vector_store %arg8[%c0_6, %c0_7, %c273], %21 {strides = array<i32>} : memref<2x4x290xf32, #tpu.memory_space<vmem>>, vector<2x4x17xf32>,
    %c0_8 = arith.constant 0 : index
    %c0_9 = arith.constant 0 : index
    %c0_10 = arith.constant 0 : index
    %24 = vector.load %arg0[%c0_8, %c0_9, %c0_10] : memref<2x4x256xf32, #tpu.memory_space<vmem>>, vector<2x4x256xf32>
    %c0_11 = arith.constant 0 : index
    %c0_12 = arith.constant 0 : index
    %c17 = arith.constant 17 : index
    %25 = vector.load %arg8[%c0_11, %c0_12, %c17] : memref<2x4x290xf32, #tpu.memory_space<vmem>>, vector<2x4x256xf32>
    tpu.vector_store %arg8[%c0_11, %c0_12, %c17], %24 {strides = array<i32>} : memref<2x4x290xf32, #tpu.memory_space<vmem>>, vector<2x4x256xf32>,
    %c0_13 = arith.constant 0 : index
    %c0_14 = arith.constant 0 : index
    %c0_15 = arith.constant 0 : index
    %26 = vector.load %arg8[%c0_13, %c0_14, %c0_15] : memref<2x4x290xf32, #tpu.memory_space<vmem>>, vector<2x4x256xf32>
    %cst_16 = arith.constant 0.000000e+00 : f32
    %27 = vector.shape_cast %18 : vector<1x1x256xi1> to vector<1x1x256xi1>
    %28 = vector.broadcast %27 : vector<1x1x256xi1> to vector<2x4x256xi1>
    %29 = vector.broadcast %cst_16 : f32 to vector<2x4x256xf32>
    %30 = arith.select %28, %26, %29 : vector<2x4x256xi1>, vector<2x4x256xf32>
    %c0_17 = arith.constant 0 : index
    %c0_18 = arith.constant 0 : index
    %c0_19 = arith.constant 0 : index
    %31 = vector.load %arg9[%c0_17, %c0_18, %c0_19] : memref<2x36x256xf32, #tpu.memory_space<vmem>>, vector<2x4x256xf32>
    tpu.vector_store %arg9[%c0_17, %c0_18, %c0_19], %30 {strides = array<i32>} : memref<2x36x256xf32, #tpu.memory_space<vmem>>, vector<2x4x256xf32>,
    %c0_20 = arith.constant 0 : index
    %c0_21 = arith.constant 0 : index
    %c1 = arith.constant 1 : index
    %32 = vector.load %arg8[%c0_20, %c0_21, %c1] : memref<2x4x290xf32, #tpu.memory_space<vmem>>, vector<2x4x256xf32>
    %c0_22 = arith.constant 0 : index
    %c4 = arith.constant 4 : index
    %c0_23 = arith.constant 0 : index
    %33 = vector.load %arg9[%c0_22, %c4, %c0_23] : memref<2x36x256xf32, #tpu.memory_space<vmem>>, vector<2x4x256xf32>
    tpu.vector_store %arg9[%c0_22, %c4, %c0_23], %32 {strides = array<i32>} : memref<2x36x256xf32, #tpu.memory_space<vmem>>, vector<2x4x256xf32>,
    %c0_24 = arith.constant 0 : index
    %c0_25 = arith.constant 0 : index
    %c2 = arith.constant 2 : index
    %34 = vector.load %arg8[%c0_24, %c0_25, %c2] : memref<2x4x290xf32, #tpu.memory_space<vmem>>, vector<2x4x256xf32>
    %cst_26 = arith.constant 0.000000e+00 : f32
    %35 = vector.shape_cast %20 : vector<1x1x256xi1> to vector<1x1x256xi1>
    %36 = vector.broadcast %35 : vector<1x1x256xi1> to vector<2x4x256xi1>
    %37 = vector.broadcast %cst_26 : f32 to vector<2x4x256xf32>
    %38 = arith.select %36, %34, %37 : vector<2x4x256xi1>, vector<2x4x256xf32>
    %c0_27 = arith.constant 0 : index
    %c8 = arith.constant 8 : index
    %c0_28 = arith.constant 0 : index
    %39 = vector.load %arg9[%c0_27, %c8, %c0_28] : memref<2x36x256xf32, #tpu.memory_space<vmem>>, vector<2x4x256xf32>
    tpu.vector_store %arg9[%c0_27, %c8, %c0_28], %38 {strides = array<i32>} : memref<2x36x256xf32, #tpu.memory_space<vmem>>, vector<2x4x256xf32>,
    %c0_29 = arith.constant 0 : index
    %c0_30 = arith.constant 0 : index
    %c16 = arith.constant 16 : index
    %40 = vector.load %arg8[%c0_29, %c0_30, %c16] : memref<2x4x290xf32, #tpu.memory_space<vmem>>, vector<2x4x256xf32>
    %cst_31 = arith.constant 0.000000e+00 : f32
    %41 = vector.shape_cast %18 : vector<1x1x256xi1> to vector<1x1x256xi1>
    %42 = vector.broadcast %41 : vector<1x1x256xi1> to vector<2x4x256xi1>
    %43 = vector.broadcast %cst_31 : f32 to vector<2x4x256xf32>
    %44 = arith.select %42, %40, %43 : vector<2x4x256xi1>, vector<2x4x256xf32>
    %c0_32 = arith.constant 0 : index
    %c12 = arith.constant 12 : index
    %c0_33 = arith.constant 0 : index
    %45 = vector.load %arg9[%c0_32, %c12, %c0_33] : memref<2x36x256xf32, #tpu.memory_space<vmem>>, vector<2x4x256xf32>
    tpu.vector_store %arg9[%c0_32, %c12, %c0_33], %44 {strides = array<i32>} : memref<2x36x256xf32, #tpu.memory_space<vmem>>, vector<2x4x256xf32>,
    %c0_34 = arith.constant 0 : index
    %c0_35 = arith.constant 0 : index
    %c17_36 = arith.constant 17 : index
    %46 = vector.load %arg8[%c0_34, %c0_35, %c17_36] : memref<2x4x290xf32, #tpu.memory_space<vmem>>, vector<2x4x256xf32>
    %c0_37 = arith.constant 0 : index
    %c16_38 = arith.constant 16 : index
    %c0_39 = arith.constant 0 : index
    %47 = vector.load %arg9[%c0_37, %c16_38, %c0_39] : memref<2x36x256xf32, #tpu.memory_space<vmem>>, vector<2x4x256xf32>
    tpu.vector_store %arg9[%c0_37, %c16_38, %c0_39], %46 {strides = array<i32>} : memref<2x36x256xf32, #tpu.memory_space<vmem>>, vector<2x4x256xf32>,
    %c0_40 = arith.constant 0 : index
    %c0_41 = arith.constant 0 : index
    %c18 = arith.constant 18 : index
    %48 = vector.load %arg8[%c0_40, %c0_41, %c18] : memref<2x4x290xf32, #tpu.memory_space<vmem>>, vector<2x4x256xf32>
    %cst_42 = arith.constant 0.000000e+00 : f32
    %49 = vector.shape_cast %20 : vector<1x1x256xi1> to vector<1x1x256xi1>
    %50 = vector.broadcast %49 : vector<1x1x256xi1> to vector<2x4x256xi1>
    %51 = vector.broadcast %cst_42 : f32 to vector<2x4x256xf32>
    %52 = arith.select %50, %48, %51 : vector<2x4x256xi1>, vector<2x4x256xf32>
    %c0_43 = arith.constant 0 : index
    %c20 = arith.constant 20 : index
    %c0_44 = arith.constant 0 : index
    %53 = vector.load %arg9[%c0_43, %c20, %c0_44] : memref<2x36x256xf32, #tpu.memory_space<vmem>>, vector<2x4x256xf32>
    tpu.vector_store %arg9[%c0_43, %c20, %c0_44], %52 {strides = array<i32>} : memref<2x36x256xf32, #tpu.memory_space<vmem>>, vector<2x4x256xf32>,
    %c0_45 = arith.constant 0 : index
    %c0_46 = arith.constant 0 : index
    %c32 = arith.constant 32 : index
    %54 = vector.load %arg8[%c0_45, %c0_46, %c32] : memref<2x4x290xf32, #tpu.memory_space<vmem>>, vector<2x4x256xf32>
    %cst_47 = arith.constant 0.000000e+00 : f32
    %55 = vector.shape_cast %18 : vector<1x1x256xi1> to vector<1x1x256xi1>
    %56 = vector.broadcast %55 : vector<1x1x256xi1> to vector<2x4x256xi1>
    %57 = vector.broadcast %cst_47 : f32 to vector<2x4x256xf32>
    %58 = arith.select %56, %54, %57 : vector<2x4x256xi1>, vector<2x4x256xf32>
    %c0_48 = arith.constant 0 : index
    %c24 = arith.constant 24 : index
    %c0_49 = arith.constant 0 : index
    %59 = vector.load %arg9[%c0_48, %c24, %c0_49] : memref<2x36x256xf32, #tpu.memory_space<vmem>>, vector<2x4x256xf32>
    tpu.vector_store %arg9[%c0_48, %c24, %c0_49], %58 {strides = array<i32>} : memref<2x36x256xf32, #tpu.memory_space<vmem>>, vector<2x4x256xf32>,
    %c0_50 = arith.constant 0 : index
    %c0_51 = arith.constant 0 : index
    %c33 = arith.constant 33 : index
    %60 = vector.load %arg8[%c0_50, %c0_51, %c33] : memref<2x4x290xf32, #tpu.memory_space<vmem>>, vector<2x4x256xf32>
    %c0_52 = arith.constant 0 : index
    %c28 = arith.constant 28 : index
    %c0_53 = arith.constant 0 : index
    %61 = vector.load %arg9[%c0_52, %c28, %c0_53] : memref<2x36x256xf32, #tpu.memory_space<vmem>>, vector<2x4x256xf32>
    tpu.vector_store %arg9[%c0_52, %c28, %c0_53], %60 {strides = array<i32>} : memref<2x36x256xf32, #tpu.memory_space<vmem>>, vector<2x4x256xf32>,
    %c0_54 = arith.constant 0 : index
    %c0_55 = arith.constant 0 : index
    %c34 = arith.constant 34 : index
    %62 = vector.load %arg8[%c0_54, %c0_55, %c34] : memref<2x4x290xf32, #tpu.memory_space<vmem>>, vector<2x4x256xf32>
    %cst_56 = arith.constant 0.000000e+00 : f32
    %63 = vector.shape_cast %20 : vector<1x1x256xi1> to vector<1x1x256xi1>
    %64 = vector.broadcast %63 : vector<1x1x256xi1> to vector<2x4x256xi1>
    %65 = vector.broadcast %cst_56 : f32 to vector<2x4x256xf32>
    %66 = arith.select %64, %62, %65 : vector<2x4x256xi1>, vector<2x4x256xf32>
    %c0_57 = arith.constant 0 : index
    %c32_58 = arith.constant 32 : index
    %c0_59 = arith.constant 0 : index
    %67 = vector.load %arg9[%c0_57, %c32_58, %c0_59] : memref<2x36x256xf32, #tpu.memory_space<vmem>>, vector<2x4x256xf32>
    tpu.vector_store %arg9[%c0_57, %c32_58, %c0_59], %66 {strides = array<i32>} : memref<2x36x256xf32, #tpu.memory_space<vmem>>, vector<2x4x256xf32>,
    %c0_60 = arith.constant 0 : index
    %c0_61 = arith.constant 0 : index
    %68 = vector.load %arg1[%c0_60, %c0_61] : memref<4x36xf32, #tpu.memory_space<vmem>>, vector<4x36xf32>
    %c0_62 = arith.constant 0 : index
    %c0_63 = arith.constant 0 : index
    %c0_64 = arith.constant 0 : index
    %69 = vector.load %arg9[%c0_62, %c0_63, %c0_64] : memref<2x36x256xf32, #tpu.memory_space<vmem>>, vector<1x36x256xf32>
    %70 = vector.shape_cast %69 : vector<1x36x256xf32> to vector<36x256xf32>
    %cst_65 = arith.constant dense<0.000000e+00> : vector<4x256xf32>
    %71 = tpu.matmul %68, %70, %cst_65 {dimension_numbers = #tpu.dot_dimension_numbers<[1], [0], [0], [1], [0, 0, 1, 1], [], []>} : vector<4x36xf32>, vector<36x256xf32>, vector<4x256xf32> -> vector<4x256xf32>
    %c1_66 = arith.constant 1 : index
    %c0_67 = arith.constant 0 : index
    %c0_68 = arith.constant 0 : index
    %72 = vector.load %arg9[%c1_66, %c0_67, %c0_68] : memref<2x36x256xf32, #tpu.memory_space<vmem>>, vector<1x36x256xf32>
    %73 = vector.shape_cast %72 : vector<1x36x256xf32> to vector<36x256xf32>
    %cst_69 = arith.constant dense<0.000000e+00> : vector<4x256xf32>
    %74 = tpu.matmul %68, %73, %cst_69 {dimension_numbers = #tpu.dot_dimension_numbers<[1], [0], [0], [1], [0, 0, 1, 1], [], []>} : vector<4x36xf32>, vector<36x256xf32>, vector<4x256xf32> -> vector<4x256xf32>
    %75 = vector.shape_cast %71 : vector<4x256xf32> to vector<1x4x256xf32>
    %76 = vector.shape_cast %74 : vector<4x256xf32> to vector<1x4x256xf32>
    %77 = tpu.concatenate %75, %76 in 0 : vector<1x4x256xf32>, vector<1x4x256xf32> -> vector<2x4x256xf32>
    %cst_70 = arith.constant dense<0.000000e+00> : vector<2x4xf32>
    %78 = vector.multi_reduction <add>, %77, %cst_70 [2] : vector<2x4x256xf32> to vector<2x4xf32>
    %79 = vector.shape_cast %78 : vector<2x4xf32> to vector<2x4x1xf32>
    %cst_71 = arith.constant dense<0.000000e+00> : vector<4x1xf32>
    %80 = vector.multi_reduction <add>, %79, %cst_71 [0] : vector<2x4x1xf32> to vector<4x1xf32>
    %81 = vector.shape_cast %80 : vector<4x1xf32> to vector<1x4x1xf32>
    %82 = arith.mulf %77, %77 : vector<2x4x256xf32>
    %cst_72 = arith.constant dense<0.000000e+00> : vector<2x4xf32>
    %83 = vector.multi_reduction <add>, %82, %cst_72 [2] : vector<2x4x256xf32> to vector<2x4xf32>
    %84 = vector.shape_cast %83 : vector<2x4xf32> to vector<2x4x1xf32>
    %cst_73 = arith.constant dense<0.000000e+00> : vector<4x1xf32>
    %85 = vector.multi_reduction <add>, %84, %cst_73 [0] : vector<2x4x1xf32> to vector<4x1xf32>
    %86 = vector.shape_cast %85 : vector<4x1xf32> to vector<1x4x1xf32>
    %cst_74 = arith.constant 5.120000e+02 : f32
    %87 = vector.broadcast %cst_74 : f32 to vector<1x4x1xf32>
    %88 = arith.divf %81, %87 : vector<1x4x1xf32>
    %cst_75 = arith.constant 5.120000e+02 : f32
    %89 = vector.broadcast %cst_75 : f32 to vector<1x4x1xf32>
    %90 = arith.divf %86, %89 : vector<1x4x1xf32>
    %91 = arith.mulf %88, %88 : vector<1x4x1xf32>
    %92 = arith.subf %90, %91 : vector<1x4x1xf32>
    %c0_76 = arith.constant 0 : index
    %c0_77 = arith.constant 0 : index
    %c0_78 = arith.constant 0 : index
    %93 = vector.load %arg2[%c0_76, %c0_77, %c0_78] : memref<1x4x1xf32, #tpu.memory_space<vmem>>, vector<1x4x1xf32>
    %cst_79 = arith.constant 9.99999974E-6 : f32
    %94 = vector.broadcast %cst_79 : f32 to vector<1x4x1xf32>
    %95 = arith.addf %92, %94 : vector<1x4x1xf32>
    %96 = math.rsqrt %95 : vector<1x4x1xf32>
    %97 = arith.mulf %93, %96 : vector<1x4x1xf32>
    %c0_80 = arith.constant 0 : index
    %c0_81 = arith.constant 0 : index
    %c0_82 = arith.constant 0 : index
    %98 = vector.load %arg3[%c0_80, %c0_81, %c0_82] : memref<1x4x1xf32, #tpu.memory_space<vmem>>, vector<1x4x1xf32>
    %99 = arith.mulf %88, %97 : vector<1x4x1xf32>
    %100 = arith.subf %98, %99 : vector<1x4x1xf32>
    %101 = vector.broadcast %97 : vector<1x4x1xf32> to vector<2x4x256xf32>
    %102 = arith.mulf %77, %101 : vector<2x4x256xf32>
    %103 = vector.broadcast %100 : vector<1x4x1xf32> to vector<2x4x256xf32>
    %104 = arith.addf %102, %103 : vector<2x4x256xf32>
    %cst_83 = arith.constant 0.000000e+00 : f32
    %105 = vector.broadcast %cst_83 : f32 to vector<2x4x256xf32>
    %106 = arith.maximumf %104, %105 : vector<2x4x256xf32>
    %c0_84 = arith.constant 0 : index
    %c0_85 = arith.constant 0 : index
    %c17_86 = arith.constant 17 : index
    %107 = vector.load %arg8[%c0_84, %c0_85, %c17_86] : memref<2x4x290xf32, #tpu.memory_space<vmem>>, vector<2x4x256xf32>
    tpu.vector_store %arg8[%c0_84, %c0_85, %c17_86], %106 {strides = array<i32>} : memref<2x4x290xf32, #tpu.memory_space<vmem>>, vector<2x4x256xf32>,
    %c0_87 = arith.constant 0 : index
    %c0_88 = arith.constant 0 : index
    %c0_89 = arith.constant 0 : index
    %108 = vector.load %arg8[%c0_87, %c0_88, %c0_89] : memref<2x4x290xf32, #tpu.memory_space<vmem>>, vector<2x4x256xf32>
    %cst_90 = arith.constant 0.000000e+00 : f32
    %109 = vector.shape_cast %18 : vector<1x1x256xi1> to vector<1x1x256xi1>
    %110 = vector.broadcast %109 : vector<1x1x256xi1> to vector<2x4x256xi1>
    %111 = vector.broadcast %cst_90 : f32 to vector<2x4x256xf32>
    %112 = arith.select %110, %108, %111 : vector<2x4x256xi1>, vector<2x4x256xf32>
    %c0_91 = arith.constant 0 : index
    %c0_92 = arith.constant 0 : index
    %c0_93 = arith.constant 0 : index
    %113 = vector.load %arg9[%c0_91, %c0_92, %c0_93] : memref<2x36x256xf32, #tpu.memory_space<vmem>>, vector<2x4x256xf32>
    tpu.vector_store %arg9[%c0_91, %c0_92, %c0_93], %112 {strides = array<i32>} : memref<2x36x256xf32, #tpu.memory_space<vmem>>, vector<2x4x256xf32>,
    %c0_94 = arith.constant 0 : index
    %c0_95 = arith.constant 0 : index
    %c1_96 = arith.constant 1 : index
    %114 = vector.load %arg8[%c0_94, %c0_95, %c1_96] : memref<2x4x290xf32, #tpu.memory_space<vmem>>, vector<2x4x256xf32>
    %c0_97 = arith.constant 0 : index
    %c4_98 = arith.constant 4 : index
    %c0_99 = arith.constant 0 : index
    %115 = vector.load %arg9[%c0_97, %c4_98, %c0_99] : memref<2x36x256xf32, #tpu.memory_space<vmem>>, vector<2x4x256xf32>
    tpu.vector_store %arg9[%c0_97, %c4_98, %c0_99], %114 {strides = array<i32>} : memref<2x36x256xf32, #tpu.memory_space<vmem>>, vector<2x4x256xf32>,
    %c0_100 = arith.constant 0 : index
    %c0_101 = arith.constant 0 : index
    %c2_102 = arith.constant 2 : index
    %116 = vector.load %arg8[%c0_100, %c0_101, %c2_102] : memref<2x4x290xf32, #tpu.memory_space<vmem>>, vector<2x4x256xf32>
    %cst_103 = arith.constant 0.000000e+00 : f32
    %117 = vector.shape_cast %20 : vector<1x1x256xi1> to vector<1x1x256xi1>
    %118 = vector.broadcast %117 : vector<1x1x256xi1> to vector<2x4x256xi1>
    %119 = vector.broadcast %cst_103 : f32 to vector<2x4x256xf32>
    %120 = arith.select %118, %116, %119 : vector<2x4x256xi1>, vector<2x4x256xf32>
    %c0_104 = arith.constant 0 : index
    %c8_105 = arith.constant 8 : index
    %c0_106 = arith.constant 0 : index
    %121 = vector.load %arg9[%c0_104, %c8_105, %c0_106] : memref<2x36x256xf32, #tpu.memory_space<vmem>>, vector<2x4x256xf32>
    tpu.vector_store %arg9[%c0_104, %c8_105, %c0_106], %120 {strides = array<i32>} : memref<2x36x256xf32, #tpu.memory_space<vmem>>, vector<2x4x256xf32>,
    %c0_107 = arith.constant 0 : index
    %c0_108 = arith.constant 0 : index
    %c16_109 = arith.constant 16 : index
    %122 = vector.load %arg8[%c0_107, %c0_108, %c16_109] : memref<2x4x290xf32, #tpu.memory_space<vmem>>, vector<2x4x256xf32>
    %cst_110 = arith.constant 0.000000e+00 : f32
    %123 = vector.shape_cast %18 : vector<1x1x256xi1> to vector<1x1x256xi1>
    %124 = vector.broadcast %123 : vector<1x1x256xi1> to vector<2x4x256xi1>
    %125 = vector.broadcast %cst_110 : f32 to vector<2x4x256xf32>
    %126 = arith.select %124, %122, %125 : vector<2x4x256xi1>, vector<2x4x256xf32>
    %c0_111 = arith.constant 0 : index
    %c12_112 = arith.constant 12 : index
    %c0_113 = arith.constant 0 : index
    %127 = vector.load %arg9[%c0_111, %c12_112, %c0_113] : memref<2x36x256xf32, #tpu.memory_space<vmem>>, vector<2x4x256xf32>
    tpu.vector_store %arg9[%c0_111, %c12_112, %c0_113], %126 {strides = array<i32>} : memref<2x36x256xf32, #tpu.memory_space<vmem>>, vector<2x4x256xf32>,
    %c0_114 = arith.constant 0 : index
    %c0_115 = arith.constant 0 : index
    %c17_116 = arith.constant 17 : index
    %128 = vector.load %arg8[%c0_114, %c0_115, %c17_116] : memref<2x4x290xf32, #tpu.memory_space<vmem>>, vector<2x4x256xf32>
    %c0_117 = arith.constant 0 : index
    %c16_118 = arith.constant 16 : index
    %c0_119 = arith.constant 0 : index
    %129 = vector.load %arg9[%c0_117, %c16_118, %c0_119] : memref<2x36x256xf32, #tpu.memory_space<vmem>>, vector<2x4x256xf32>
    tpu.vector_store %arg9[%c0_117, %c16_118, %c0_119], %128 {strides = array<i32>} : memref<2x36x256xf32, #tpu.memory_space<vmem>>, vector<2x4x256xf32>,
    %c0_120 = arith.constant 0 : index
    %c0_121 = arith.constant 0 : index
    %c18_122 = arith.constant 18 : index
    %130 = vector.load %arg8[%c0_120, %c0_121, %c18_122] : memref<2x4x290xf32, #tpu.memory_space<vmem>>, vector<2x4x256xf32>
    %cst_123 = arith.constant 0.000000e+00 : f32
    %131 = vector.shape_cast %20 : vector<1x1x256xi1> to vector<1x1x256xi1>
    %132 = vector.broadcast %131 : vector<1x1x256xi1> to vector<2x4x256xi1>
    %133 = vector.broadcast %cst_123 : f32 to vector<2x4x256xf32>
    %134 = arith.select %132, %130, %133 : vector<2x4x256xi1>, vector<2x4x256xf32>
    %c0_124 = arith.constant 0 : index
    %c20_125 = arith.constant 20 : index
    %c0_126 = arith.constant 0 : index
    %135 = vector.load %arg9[%c0_124, %c20_125, %c0_126] : memref<2x36x256xf32, #tpu.memory_space<vmem>>, vector<2x4x256xf32>
    tpu.vector_store %arg9[%c0_124, %c20_125, %c0_126], %134 {strides = array<i32>} : memref<2x36x256xf32, #tpu.memory_space<vmem>>, vector<2x4x256xf32>,
    %c0_127 = arith.constant 0 : index
    %c0_128 = arith.constant 0 : index
    %c32_129 = arith.constant 32 : index
    %136 = vector.load %arg8[%c0_127, %c0_128, %c32_129] : memref<2x4x290xf32, #tpu.memory_space<vmem>>, vector<2x4x256xf32>
    %cst_130 = arith.constant 0.000000e+00 : f32
    %137 = vector.shape_cast %18 : vector<1x1x256xi1> to vector<1x1x256xi1>
    %138 = vector.broadcast %137 : vector<1x1x256xi1> to vector<2x4x256xi1>
    %139 = vector.broadcast %cst_130 : f32 to vector<2x4x256xf32>
    %140 = arith.select %138, %136, %139 : vector<2x4x256xi1>, vector<2x4x256xf32>
    %c0_131 = arith.constant 0 : index
    %c24_132 = arith.constant 24 : index
    %c0_133 = arith.constant 0 : index
    %141 = vector.load %arg9[%c0_131, %c24_132, %c0_133] : memref<2x36x256xf32, #tpu.memory_space<vmem>>, vector<2x4x256xf32>
    tpu.vector_store %arg9[%c0_131, %c24_132, %c0_133], %140 {strides = array<i32>} : memref<2x36x256xf32, #tpu.memory_space<vmem>>, vector<2x4x256xf32>,
    %c0_134 = arith.constant 0 : index
    %c0_135 = arith.constant 0 : index
    %c33_136 = arith.constant 33 : index
    %142 = vector.load %arg8[%c0_134, %c0_135, %c33_136] : memref<2x4x290xf32, #tpu.memory_space<vmem>>, vector<2x4x256xf32>
    %c0_137 = arith.constant 0 : index
    %c28_138 = arith.constant 28 : index
    %c0_139 = arith.constant 0 : index
    %143 = vector.load %arg9[%c0_137, %c28_138, %c0_139] : memref<2x36x256xf32, #tpu.memory_space<vmem>>, vector<2x4x256xf32>
    tpu.vector_store %arg9[%c0_137, %c28_138, %c0_139], %142 {strides = array<i32>} : memref<2x36x256xf32, #tpu.memory_space<vmem>>, vector<2x4x256xf32>,
    %c0_140 = arith.constant 0 : index
    %c0_141 = arith.constant 0 : index
    %c34_142 = arith.constant 34 : index
    %144 = vector.load %arg8[%c0_140, %c0_141, %c34_142] : memref<2x4x290xf32, #tpu.memory_space<vmem>>, vector<2x4x256xf32>
    %cst_143 = arith.constant 0.000000e+00 : f32
    %145 = vector.shape_cast %20 : vector<1x1x256xi1> to vector<1x1x256xi1>
    %146 = vector.broadcast %145 : vector<1x1x256xi1> to vector<2x4x256xi1>
    %147 = vector.broadcast %cst_143 : f32 to vector<2x4x256xf32>
    %148 = arith.select %146, %144, %147 : vector<2x4x256xi1>, vector<2x4x256xf32>
    %c0_144 = arith.constant 0 : index
    %c32_145 = arith.constant 32 : index
    %c0_146 = arith.constant 0 : index
    %149 = vector.load %arg9[%c0_144, %c32_145, %c0_146] : memref<2x36x256xf32, #tpu.memory_space<vmem>>, vector<2x4x256xf32>
    tpu.vector_store %arg9[%c0_144, %c32_145, %c0_146], %148 {strides = array<i32>} : memref<2x36x256xf32, #tpu.memory_space<vmem>>, vector<2x4x256xf32>,
    %c0_147 = arith.constant 0 : index
    %c0_148 = arith.constant 0 : index
    %150 = vector.load %arg4[%c0_147, %c0_148] : memref<4x36xf32, #tpu.memory_space<vmem>>, vector<4x36xf32>
    %c0_149 = arith.constant 0 : index
    %c0_150 = arith.constant 0 : index
    %c0_151 = arith.constant 0 : index
    %151 = vector.load %arg9[%c0_149, %c0_150, %c0_151] : memref<2x36x256xf32, #tpu.memory_space<vmem>>, vector<1x36x256xf32>
    %152 = vector.shape_cast %151 : vector<1x36x256xf32> to vector<36x256xf32>
    %cst_152 = arith.constant dense<0.000000e+00> : vector<4x256xf32>
    %153 = tpu.matmul %150, %152, %cst_152 {dimension_numbers = #tpu.dot_dimension_numbers<[1], [0], [0], [1], [0, 0, 1, 1], [], []>} : vector<4x36xf32>, vector<36x256xf32>, vector<4x256xf32> -> vector<4x256xf32>
    %c1_153 = arith.constant 1 : index
    %c0_154 = arith.constant 0 : index
    %c0_155 = arith.constant 0 : index
    %154 = vector.load %arg9[%c1_153, %c0_154, %c0_155] : memref<2x36x256xf32, #tpu.memory_space<vmem>>, vector<1x36x256xf32>
    %155 = vector.shape_cast %154 : vector<1x36x256xf32> to vector<36x256xf32>
    %cst_156 = arith.constant dense<0.000000e+00> : vector<4x256xf32>
    %156 = tpu.matmul %150, %155, %cst_156 {dimension_numbers = #tpu.dot_dimension_numbers<[1], [0], [0], [1], [0, 0, 1, 1], [], []>} : vector<4x36xf32>, vector<36x256xf32>, vector<4x256xf32> -> vector<4x256xf32>
    %157 = vector.shape_cast %153 : vector<4x256xf32> to vector<1x4x256xf32>
    %158 = vector.shape_cast %156 : vector<4x256xf32> to vector<1x4x256xf32>
    %159 = tpu.concatenate %157, %158 in 0 : vector<1x4x256xf32>, vector<1x4x256xf32> -> vector<2x4x256xf32>
    %cst_157 = arith.constant dense<0.000000e+00> : vector<2x4xf32>
    %160 = vector.multi_reduction <add>, %159, %cst_157 [2] : vector<2x4x256xf32> to vector<2x4xf32>
    %161 = vector.shape_cast %160 : vector<2x4xf32> to vector<2x4x1xf32>
    %cst_158 = arith.constant dense<0.000000e+00> : vector<4x1xf32>
    %162 = vector.multi_reduction <add>, %161, %cst_158 [0] : vector<2x4x1xf32> to vector<4x1xf32>
    %163 = vector.shape_cast %162 : vector<4x1xf32> to vector<1x4x1xf32>
    %164 = arith.mulf %159, %159 : vector<2x4x256xf32>
    %cst_159 = arith.constant dense<0.000000e+00> : vector<2x4xf32>
    %165 = vector.multi_reduction <add>, %164, %cst_159 [2] : vector<2x4x256xf32> to vector<2x4xf32>
    %166 = vector.shape_cast %165 : vector<2x4xf32> to vector<2x4x1xf32>
    %cst_160 = arith.constant dense<0.000000e+00> : vector<4x1xf32>
    %167 = vector.multi_reduction <add>, %166, %cst_160 [0] : vector<2x4x1xf32> to vector<4x1xf32>
    %168 = vector.shape_cast %167 : vector<4x1xf32> to vector<1x4x1xf32>
    %cst_161 = arith.constant 5.120000e+02 : f32
    %169 = vector.broadcast %cst_161 : f32 to vector<1x4x1xf32>
    %170 = arith.divf %163, %169 : vector<1x4x1xf32>
    %cst_162 = arith.constant 5.120000e+02 : f32
    %171 = vector.broadcast %cst_162 : f32 to vector<1x4x1xf32>
    %172 = arith.divf %168, %171 : vector<1x4x1xf32>
    %173 = arith.mulf %170, %170 : vector<1x4x1xf32>
    %174 = arith.subf %172, %173 : vector<1x4x1xf32>
    %c0_163 = arith.constant 0 : index
    %c0_164 = arith.constant 0 : index
    %c0_165 = arith.constant 0 : index
    %175 = vector.load %arg5[%c0_163, %c0_164, %c0_165] : memref<1x4x1xf32, #tpu.memory_space<vmem>>, vector<1x4x1xf32>
    %cst_166 = arith.constant 9.99999974E-6 : f32
    %176 = vector.broadcast %cst_166 : f32 to vector<1x4x1xf32>
    %177 = arith.addf %174, %176 : vector<1x4x1xf32>
    %178 = math.rsqrt %177 : vector<1x4x1xf32>
    %179 = arith.mulf %175, %178 : vector<1x4x1xf32>
    %c0_167 = arith.constant 0 : index
    %c0_168 = arith.constant 0 : index
    %c0_169 = arith.constant 0 : index
    %180 = vector.load %arg6[%c0_167, %c0_168, %c0_169] : memref<1x4x1xf32, #tpu.memory_space<vmem>>, vector<1x4x1xf32>
    %181 = arith.mulf %170, %179 : vector<1x4x1xf32>
    %182 = arith.subf %180, %181 : vector<1x4x1xf32>
    %183 = vector.broadcast %179 : vector<1x4x1xf32> to vector<2x4x256xf32>
    %184 = arith.mulf %159, %183 : vector<2x4x256xf32>
    %185 = vector.broadcast %182 : vector<1x4x1xf32> to vector<2x4x256xf32>
    %186 = arith.addf %184, %185 : vector<2x4x256xf32>
    %187 = arith.addf %186, %24 : vector<2x4x256xf32>
    %cst_170 = arith.constant 0.000000e+00 : f32
    %188 = vector.broadcast %cst_170 : f32 to vector<2x4x256xf32>
    %189 = arith.maximumf %187, %188 : vector<2x4x256xf32>
    %c0_171 = arith.constant 0 : index
    %c0_172 = arith.constant 0 : index
    %c0_173 = arith.constant 0 : index
    %190 = vector.load %arg7[%c0_171, %c0_172, %c0_173] : memref<2x4x256xf32, #tpu.memory_space<vmem>>, vector<2x4x256xf32>
    tpu.vector_store %arg7[%c0_171, %c0_172, %c0_173], %189 {strides = array<i32>} : memref<2x4x256xf32, #tpu.memory_space<vmem>>, vector<2x4x256xf32>,
    return
  }
}

</mosaic_0001>

<llo_original>
// kernel: basic_block.1
$region0: #{basic_block.1}
  #allocation0 [shape = 'u32[]', space=smem, size = 0x4, offset = 0x4, fixed_abs, tag = 'smem constant byte address 0x4 - core index']
  #allocation1 [shape = 'u32[144,128]{1,0:T(1,128)}', space=vmem, size = 0x12000, scoped, tag = 'internal scratch']
  #allocation2 [shape = 'f32[2,4,290]{2,1,0:T(4,128)}', space=vmem, size = 0x3000, scoped, tag = 'scratch operand']
  #allocation3 [shape = 'f32[2,36,256]{2,1,0:T(8,128)}', space=vmem, size = 0x14000, scoped, tag = 'scratch operand']
  %s0 = inlined_call_operand.vmem [shape: f32[2,4,256], index: 0, kind: input, shape index: {}]
  %s1 = inlined_call_operand.vmem [shape: f32[4,36], index: 1, kind: input, shape index: {}]
  %s2 = inlined_call_operand.vmem [shape: f32[1,4,1], index: 2, kind: input, shape index: {}]
  %s3 = inlined_call_operand.vmem [shape: f32[1,4,1], index: 3, kind: input, shape index: {}]
  %s4 = inlined_call_operand.vmem [shape: f32[4,36], index: 4, kind: input, shape index: {}]
  %s5 = inlined_call_operand.vmem [shape: f32[1,4,1], index: 5, kind: input, shape index: {}]
  %s6 = inlined_call_operand.vmem [shape: f32[1,4,1], index: 6, kind: input, shape index: {}]
  %s7 = inlined_call_operand.vmem [shape: f32[2,4,256], index: 7, kind: output, shape index: {}]
  %s8 = sld [smem:[#allocation0]]
  $region38: #{basic_block.1} parent=0
    _
  %s10 = ssub.s32 1, %s8
  %s11 = scalar_select 0, %s10, %s8
  // Predicated region
  $region2: #{basic_block.1} parent=0 // pred_check
    _
  $region3: #{basic_block.1} parent=0 // pred_check_branch
    %13 = sbr.rel (0) target = $region5
  $region4: #{basic_block.1} parent=0 // pred_region
    _
  $region5: #{basic_block.1} parent=0 // pred_fallthru
    _
  // Predicated region
  $region6: #{basic_block.1} parent=0 // pred_check
    _
  $region7: #{basic_block.1} parent=0 // pred_check_branch
    %15 = sbr.rel (0) target = $region9
  $region8: #{basic_block.1} parent=0 // pred_region
    _
  $region9: #{basic_block.1} parent=0 // pred_fallthru
    _
  // Predicated region
  $region10: #{basic_block.1} parent=0 // pred_check
    _
  $region11: #{basic_block.1} parent=0 // pred_check_branch
    %17 = sbr.rel (0) target = $region13
  $region12: #{basic_block.1} parent=0 // pred_region
    _
  $region13: #{basic_block.1} parent=0 // pred_fallthru
    _
  // Predicated region
  $region14: #{basic_block.1} parent=0 // pred_check
    _
  $region15: #{basic_block.1} parent=0 // pred_check_branch
    %19 = sbr.rel (0) target = $region17
  $region16: #{basic_block.1} parent=0 // pred_region
    _
  $region17: #{basic_block.1} parent=0 // pred_fallthru
    _
  // Predicated region
  $region18: #{basic_block.1} parent=0 // pred_check
    _
  $region19: #{basic_block.1} parent=0 // pred_check_branch
    %21 = sbr.rel (0) target = $region21
  $region20: #{basic_block.1} parent=0 // pred_region
    _
  $region21: #{basic_block.1} parent=0 // pred_fallthru
    _
  // Predicated region
  $region22: #{basic_block.1} parent=0 // pred_check
    _
  $region23: #{basic_block.1} parent=0 // pred_check_branch
    %23 = sbr.rel (0) target = $region25
  $region24: #{basic_block.1} parent=0 // pred_region
    _
  $region25: #{basic_block.1} parent=0 // pred_fallthru
    _
  // Predicated region
  $region26: #{basic_block.1} parent=0 // pred_check
    _
  $region27: #{basic_block.1} parent=0 // pred_check_branch
    %25 = sbr.rel (0) target = $region29
  $region28: #{basic_block.1} parent=0 // pred_region
    _
  $region29: #{basic_block.1} parent=0 // pred_fallthru
    _
  %v26 = vlaneseq
  %v27 = vand.u32 %v26, 127
  %v28 = vadd.s32 %v27, 128
  %vm29 = vcmp.lt.s32.totalorder %v27, 0
  %v30 = vsub.s32 0, %v27
  %v31 = vsel %vm29, %v30, %v27
  %v32 = vshrl.u32 %v31, 4
  %v33 = vand.u32 %v31, 15
  %v34 = vsub.s32 0, %v33
  %v35 = vsel %vm29, %v34, %v33
  %vm36 = vcmp.lt.s32.totalorder %v28, 0
  %v37 = vsub.s32 0, %v28
  %v38 = vsel %vm36, %v37, %v28
  %v39 = vshrl.u32 %v38, 4
  %v40 = vand.u32 %v38, 15
  %v41 = vsub.s32 0, %v40
  %v42 = vsel %vm36, %v41, %v40
  %vm43 = vcmp.ne.s32.totalorder %v35, 0
  %vm44 = vcmp.ne.s32.totalorder %v42, 0
  %vm45 = vcmp.lt.s32.totalorder %v35, 0
  %vm46 = vcmp.lt.s32.totalorder %v42, 0
  %vm47 = vmand %vm45, %vm43
  %vm48 = vmand %vm46, %vm44
  %v49 = vadd.s32 %v35, 16
  %v50 = vadd.s32 %v42, 16
  %v51 = vsel %vm47, %v49, %v35
  %v52 = vsel %vm48, %v50, %v42
  %vm53 = vcmp.ge.s32.totalorder %v51, 1
  %vm54 = vcmp.ge.s32.totalorder %v52, 1
  %vm55 = vcmp.le.s32.totalorder %v51, 14
  %vm56 = vcmp.le.s32.totalorder %v52, 14
  %vm57 = vcmask 134144
  %58 = vst.msk [vmem:[#allocation2] sm:$0xf] %vm57, 0.0
  %59 = vst.msk [vmem:[#allocation2 + $0xc] sm:$0xf] %vm57, 0.0
  %vm60 = vcmask 273544
  %61 = vst.msk [vmem:[#allocation2 + $0x8] sm:$0xf] %vm60, 0.0
  %62 = vst.msk [vmem:[#allocation2 + $0x14] sm:$0xf] %vm60, 0.0
  %v63 = vld [vmem:[%s0] sm:$0xff]
  %v64 = vld [vmem:[%s0 + $0x8] sm:$0xff]
  %67 = vrot.lane.b32.xlu0 %v63, 17
  %v68 = vpop.permute.xlu0 %67
  %69 = vrot.lane.b32.xlu0 %v64, 17
  %v70 = vpop.permute.xlu0 %69
  %v71 = vrot.slane %v68, 4
  %v72 = vrot.slane %v70, 4
  %vm73 = vcmask 138240
  %v74 = vsel %vm73, %v71, %v68
  %v75 = vsel %vm73, %v72, %v70
  %vm80 = vcmask 1043592
  %vm81 = vcmask 1047556
  %vm82 = vmor %vm81, %vm80
  %83 = vst.msk [vmem:[#allocation2] sm:$0xff] %vm82, %v74
  %84 = vst.msk [vmem:[#allocation2 + $0x8] sm:$0xf] %vm57, %v71
  %85 = vst.msk [vmem:[#allocation2 + $0xc] sm:$0xff] %vm82, %v75
  %86 = vst.msk [vmem:[#allocation2 + $0x14] sm:$0xf] %vm57, %v72
  %v87 = vld [vmem:[#allocation2] sm:$0xff]
  %v88 = vld [vmem:[#allocation2 + $0xc] sm:$0xff]
  %v89 = vsel %vm53, 1, 0
  %v90 = vsel %vm54, 1, 0
  %vm91 = vcmp.eq.s32.totalorder %v89, 1
  %vm92 = vcmp.eq.s32.totalorder %v90, 1
  %v95 = vcombine.high %v87, %v87
  %v96 = vcombine.high %v88, %v88
  %v99 = vsel %vm91, %v87, 0.0
  %v100 = vsel %vm92, %v95, 0.0
  %v101 = vsel %vm91, %v88, 0.0
  %v102 = vsel %vm92, %v96, 0.0
  %103 = vst [vmem:[#allocation3] sm:$0xf] %v99
  %104 = vst [vmem:[#allocation3 + $0x8] sm:$0xf] %v100
  %105 = vst [vmem:[#allocation3 + $0x50] sm:$0xf] %v101
  %106 = vst [vmem:[#allocation3 + $0x58] sm:$0xf] %v102
  %v107 = vld [vmem:[#allocation2] sm:$0xff]
  %v108 = vld [vmem:[#allocation2 + $0x8] sm:$0xf]
  %v109 = vld [vmem:[#allocation2 + $0xc] sm:$0xff]
  %v110 = vld [vmem:[#allocation2 + $0x14] sm:$0xf]
  %v115 = vcombine.low %v107, %v107
  %v116 = vcombine.low %v108, %v108
  %v117 = vcombine.low %v109, %v109
  %v118 = vcombine.low %v110, %v110
  %119 = vrot.lane.b32.xlu0 %v115, 127
  %v120 = vpop.permute.xlu0 %119
  %121 = vrot.lane.b32.xlu0 %v107, 127
  %v122 = vpop.permute.xlu0 %121
  %123 = vrot.lane.b32.xlu0 %v116, 127
  %v124 = vpop.permute.xlu0 %123
  %125 = vrot.lane.b32.xlu0 %v117, 127
  %v126 = vpop.permute.xlu0 %125
  %127 = vrot.lane.b32.xlu0 %v109, 127
  %v128 = vpop.permute.xlu0 %127
  %129 = vrot.lane.b32.xlu0 %v118, 127
  %v130 = vpop.permute.xlu0 %129
  %vm131 = vcmask 1039360
  %v132 = vsel %vm131, %v120, %v122
  %v133 = vsel %vm131, %v122, %v124
  %v134 = vsel %vm131, %v126, %v128
  %v135 = vsel %vm131, %v128, %v130
  %140 = vst [vmem:[#allocation3] sm:$0xf0] %v132
  %141 = vst [vmem:[#allocation3 + $0x8] sm:$0xf0] %v133
  %142 = vst [vmem:[#allocation3 + $0x50] sm:$0xf0] %v134
  %143 = vst [vmem:[#allocation3 + $0x58] sm:$0xf0] %v135
  %v144 = vld [vmem:[#allocation2] sm:$0xff]
  %v145 = vld [vmem:[#allocation2 + $0x8] sm:$0xf]
  %v146 = vld [vmem:[#allocation2 + $0xc] sm:$0xff]
  %v147 = vld [vmem:[#allocation2 + $0x14] sm:$0xf]
  %v148 = vsel %vm55, 1, 0
  %v149 = vsel %vm56, 1, 0
  %vm150 = vcmp.eq.s32.totalorder %v148, 1
  %vm151 = vcmp.eq.s32.totalorder %v149, 1
  %v156 = vcombine.high %v144, %v144
  %v157 = vcombine.high %v146, %v146
  %158 = vrot.lane.b32.xlu0 %v144, 126
  %v159 = vpop.permute.xlu0 %158
  %160 = vrot.lane.b32.xlu0 %v156, 126
  %v161 = vpop.permute.xlu0 %160
  %162 = vrot.lane.b32.xlu0 %v145, 126
  %v163 = vpop.permute.xlu0 %162
  %164 = vrot.lane.b32.xlu0 %v146, 126
  %v165 = vpop.permute.xlu0 %164
  %166 = vrot.lane.b32.xlu0 %v157, 126
  %v167 = vpop.permute.xlu0 %166
  %168 = vrot.lane.b32.xlu0 %v147, 126
  %v169 = vpop.permute.xlu0 %168
  %vm170 = vcmask 1031168
  %v171 = vsel %vm170, %v159, %v161
  %v172 = vsel %vm170, %v161, %v163
  %v173 = vsel %vm170, %v165, %v167
  %v174 = vsel %vm170, %v167, %v169
  %v179 = vsel %vm150, %v171, 0.0
  %v180 = vsel %vm151, %v172, 0.0
  %v181 = vsel %vm150, %v173, 0.0
  %v182 = vsel %vm151, %v174, 0.0
  %183 = vst [vmem:[#allocation3 + $0x10] sm:$0xf] %v179
  %184 = vst [vmem:[#allocation3 + $0x18] sm:$0xf] %v180
  %185 = vst [vmem:[#allocation3 + $0x60] sm:$0xf] %v181
  %186 = vst [vmem:[#allocation3 + $0x68] sm:$0xf] %v182
  %v187 = vld [vmem:[#allocation2] sm:$0xff]
  %v188 = vld [vmem:[#allocation2 + $0x8] sm:$0xf]
  %v189 = vld [vmem:[#allocation2 + $0xc] sm:$0xff]
  %v190 = vld [vmem:[#allocation2 + $0x14] sm:$0xf]
  %v195 = vcombine.high %v187, %v187
  %v196 = vcombine.high %v189, %v189
  %197 = vrot.lane.b32.xlu0 %v187, 112
  %v198 = vpop.permute.xlu0 %197
  %199 = vrot.lane.b32.xlu0 %v195, 112
  %v200 = vpop.permute.xlu0 %199
  %201 = vrot.lane.b32.xlu0 %v188, 112
  %v202 = vpop.permute.xlu0 %201
  %203 = vrot.lane.b32.xlu0 %v189, 112
  %v204 = vpop.permute.xlu0 %203
  %205 = vrot.lane.b32.xlu0 %v196, 112
  %v206 = vpop.permute.xlu0 %205
  %207 = vrot.lane.b32.xlu0 %v190, 112
  %v208 = vpop.permute.xlu0 %207
  %vm209 = vcmask 916480
  %v210 = vsel %vm209, %v198, %v200
  %v211 = vsel %vm209, %v200, %v202
  %v212 = vsel %vm209, %v204, %v206
  %v213 = vsel %vm209, %v206, %v208
  %v218 = vsel %vm91, %v210, 0.0
  %v219 = vsel %vm92, %v211, 0.0
  %v220 = vsel %vm91, %v212, 0.0
  %v221 = vsel %vm92, %v213, 0.0
  %v226 = vrot.slane %v218, 4
  %v227 = vrot.slane %v219, 4
  %v228 = vrot.slane %v220, 4
  %v229 = vrot.slane %v221, 4
  %234 = vst [vmem:[#allocation3 + $0x10] sm:$0xf0] %v226
  %235 = vst [vmem:[#allocation3 + $0x18] sm:$0xf0] %v227
  %236 = vst [vmem:[#allocation3 + $0x60] sm:$0xf0] %v228
  %237 = vst [vmem:[#allocation3 + $0x68] sm:$0xf0] %v229
  %v238 = vld [vmem:[#allocation2] sm:$0xff]
  %v239 = vld [vmem:[#allocation2 + $0x8] sm:$0xf]
  %v240 = vld [vmem:[#allocation2 + $0xc] sm:$0xff]
  %v241 = vld [vmem:[#allocation2 + $0x14] sm:$0xf]
  %v246 = vcombine.high %v238, %v238
  %v247 = vcombine.high %v240, %v240
  %248 = vrot.lane.b32.xlu0 %v238, 111
  %v249 = vpop.permute.xlu0 %248
  %250 = vrot.lane.b32.xlu0 %v246, 111
  %v251 = vpop.permute.xlu0 %250
  %252 = vrot.lane.b32.xlu0 %v239, 111
  %v253 = vpop.permute.xlu0 %252
  %254 = vrot.lane.b32.xlu0 %v240, 111
  %v255 = vpop.permute.xlu0 %254
  %256 = vrot.lane.b32.xlu0 %v247, 111
  %v257 = vpop.permute.xlu0 %256
  %258 = vrot.lane.b32.xlu0 %v241, 111
  %v259 = vpop.permute.xlu0 %258
  %vm260 = vcmask 908288
  %v261 = vsel %vm260, %v249, %v251
  %v262 = vsel %vm260, %v251, %v253
  %v263 = vsel %vm260, %v255, %v257
  %v264 = vsel %vm260, %v257, %v259
  %269 = vst [vmem:[#allocation3 + $0x20] sm:$0xf] %v261
  %270 = vst [vmem:[#allocation3 + $0x28] sm:$0xf] %v262
  %271 = vst [vmem:[#allocation3 + $0x70] sm:$0xf] %v263
  %272 = vst [vmem:[#allocation3 + $0x78] sm:$0xf] %v264
  %v273 = vld [vmem:[#allocation2] sm:$0xff]
  %v274 = vld [vmem:[#allocation2 + $0x8] sm:$0xf]
  %v275 = vld [vmem:[#allocation2 + $0xc] sm:$0xff]
  %v276 = vld [vmem:[#allocation2 + $0x14] sm:$0xf]
  %v281 = vcombine.high %v273, %v273
  %v282 = vcombine.high %v275, %v275
  %283 = vrot.lane.b32.xlu0 %v273, 110
  %v284 = vpop.permute.xlu0 %283
  %285 = vrot.lane.b32.xlu0 %v281, 110
  %v286 = vpop.permute.xlu0 %285
  %287 = vrot.lane.b32.xlu0 %v274, 110
  %v288 = vpop.permute.xlu0 %287
  %289 = vrot.lane.b32.xlu0 %v275, 110
  %v290 = vpop.permute.xlu0 %289
  %291 = vrot.lane.b32.xlu0 %v282, 110
  %v292 = vpop.permute.xlu0 %291
  %293 = vrot.lane.b32.xlu0 %v276, 110
  %v294 = vpop.permute.xlu0 %293
  %vm295 = vcmask 900096
  %v296 = vsel %vm295, %v284, %v286
  %v297 = vsel %vm295, %v286, %v288
  %v298 = vsel %vm295, %v290, %v292
  %v299 = vsel %vm295, %v292, %v294
  %v304 = vsel %vm150, %v296, 0.0
  %v305 = vsel %vm151, %v297, 0.0
  %v306 = vsel %vm150, %v298, 0.0
  %v307 = vsel %vm151, %v299, 0.0
  %v312 = vrot.slane %v304, 4
  %v313 = vrot.slane %v305, 4
  %v314 = vrot.slane %v306, 4
  %v315 = vrot.slane %v307, 4
  %320 = vst [vmem:[#allocation3 + $0x20] sm:$0xf0] %v312
  %321 = vst [vmem:[#allocation3 + $0x28] sm:$0xf0] %v313
  %322 = vst [vmem:[#allocation3 + $0x70] sm:$0xf0] %v314
  %323 = vst [vmem:[#allocation3 + $0x78] sm:$0xf0] %v315
  %v324 = vld [vmem:[#allocation2] sm:$0xff]
  %v325 = vld [vmem:[#allocation2 + $0x8] sm:$0xf]
  %v326 = vld [vmem:[#allocation2 + $0xc] sm:$0xff]
  %v327 = vld [vmem:[#allocation2 + $0x14] sm:$0xf]
  %v332 = vcombine.high %v324, %v324
  %v333 = vcombine.high %v326, %v326
  %334 = vrot.lane.b32.xlu0 %v324, 96
  %v335 = vpop.permute.xlu0 %334
  %336 = vrot.lane.b32.xlu0 %v332, 96
  %v337 = vpop.permute.xlu0 %336
  %338 = vrot.lane.b32.xlu0 %v325, 96
  %v339 = vpop.permute.xlu0 %338
  %340 = vrot.lane.b32.xlu0 %v326, 96
  %v341 = vpop.permute.xlu0 %340
  %342 = vrot.lane.b32.xlu0 %v333, 96
  %v343 = vpop.permute.xlu0 %342
  %344 = vrot.lane.b32.xlu0 %v327, 96
  %v345 = vpop.permute.xlu0 %344
  %vm346 = vcmask 785408
  %v347 = vsel %vm346, %v335, %v337
  %v348 = vsel %vm346, %v337, %v339
  %v349 = vsel %vm346, %v341, %v343
  %v350 = vsel %vm346, %v343, %v345
  %v355 = vsel %vm91, %v347, 0.0
  %v356 = vsel %vm92, %v348, 0.0
  %v357 = vsel %vm91, %v349, 0.0
  %v358 = vsel %vm92, %v350, 0.0
  %359 = vst [vmem:[#allocation3 + $0x30] sm:$0xf] %v355
  %360 = vst [vmem:[#allocation3 + $0x38] sm:$0xf] %v356
  %361 = vst [vmem:[#allocation3 + $0x80] sm:$0xf] %v357
  %362 = vst [vmem:[#allocation3 + $0x88] sm:$0xf] %v358
  %v363 = vld [vmem:[#allocation2] sm:$0xff]
  %v364 = vld [vmem:[#allocation2 + $0x8] sm:$0xf]
  %v365 = vld [vmem:[#allocation2 + $0xc] sm:$0xff]
  %v366 = vld [vmem:[#allocation2 + $0x14] sm:$0xf]
  %v371 = vcombine.low %v363, %v363
  %v372 = vcombine.low %v364, %v364
  %v373 = vcombine.low %v365, %v365
  %v374 = vcombine.low %v366, %v366
  %375 = vrot.lane.b32.xlu0 %v371, 95
  %v376 = vpop.permute.xlu0 %375
  %377 = vrot.lane.b32.xlu0 %v363, 95
  %v378 = vpop.permute.xlu0 %377
  %379 = vrot.lane.b32.xlu0 %v372, 95
  %v380 = vpop.permute.xlu0 %379
  %381 = vrot.lane.b32.xlu0 %v373, 95
  %v382 = vpop.permute.xlu0 %381
  %383 = vrot.lane.b32.xlu0 %v365, 95
  %v384 = vpop.permute.xlu0 %383
  %385 = vrot.lane.b32.xlu0 %v374, 95
  %v386 = vpop.permute.xlu0 %385
  %vm387 = vcmask 777216
  %v388 = vsel %vm387, %v376, %v378
  %v389 = vsel %vm387, %v378, %v380
  %v390 = vsel %vm387, %v382, %v384
  %v391 = vsel %vm387, %v384, %v386
  %396 = vst [vmem:[#allocation3 + $0x30] sm:$0xf0] %v388
  %397 = vst [vmem:[#allocation3 + $0x38] sm:$0xf0] %v389
  %398 = vst [vmem:[#allocation3 + $0x80] sm:$0xf0] %v390
  %399 = vst [vmem:[#allocation3 + $0x88] sm:$0xf0] %v391
  %v400 = vld [vmem:[#allocation2] sm:$0xff]
  %v401 = vld [vmem:[#allocation2 + $0x8] sm:$0xf]
  %v402 = vld [vmem:[#allocation2 + $0xc] sm:$0xff]
  %v403 = vld [vmem:[#allocation2 + $0x14] sm:$0xf]
  %v408 = vcombine.high %v400, %v400
  %v409 = vcombine.high %v402, %v402
  %410 = vrot.lane.b32.xlu0 %v400, 94
  %v411 = vpop.permute.xlu0 %410
  %412 = vrot.lane.b32.xlu0 %v408, 94
  %v413 = vpop.permute.xlu0 %412
  %414 = vrot.lane.b32.xlu0 %v401, 94
  %v415 = vpop.permute.xlu0 %414
  %416 = vrot.lane.b32.xlu0 %v402, 94
  %v417 = vpop.permute.xlu0 %416
  %418 = vrot.lane.b32.xlu0 %v409, 94
  %v419 = vpop.permute.xlu0 %418
  %420 = vrot.lane.b32.xlu0 %v403, 94
  %v421 = vpop.permute.xlu0 %420
  %vm422 = vcmask 769024
  %v423 = vsel %vm422, %v411, %v413
  %v424 = vsel %vm422, %v413, %v415
  %v425 = vsel %vm422, %v417, %v419
  %v426 = vsel %vm422, %v419, %v421
  %v431 = vsel %vm150, %v423, 0.0
  %v432 = vsel %vm151, %v424, 0.0
  %v433 = vsel %vm150, %v425, 0.0
  %v434 = vsel %vm151, %v426, 0.0
  %435 = vst [vmem:[#allocation3 + $0x40] sm:$0xf] %v431
  %436 = vst [vmem:[#allocation3 + $0x48] sm:$0xf] %v432
  %437 = vst [vmem:[#allocation3 + $0x90] sm:$0xf] %v433
  %438 = vst [vmem:[#allocation3 + $0x98] sm:$0xf] %v434
  %v439 = vld [vmem:[%s1] sm:$0xf]
  %v440 = vld [vmem:[#allocation3] sm:$0xff]
  %v441 = vld [vmem:[#allocation3 + $0x8] sm:$0xff]
  %v442 = vld [vmem:[#allocation3 + $0x10] sm:$0xff]
  %v443 = vld [vmem:[#allocation3 + $0x18] sm:$0xff]
  %v444 = vld [vmem:[#allocation3 + $0x20] sm:$0xff]
  %v445 = vld [vmem:[#allocation3 + $0x28] sm:$0xff]
  %v446 = vld [vmem:[#allocation3 + $0x30] sm:$0xff]
  %v447 = vld [vmem:[#allocation3 + $0x38] sm:$0xff]
  %v448 = vld [vmem:[#allocation3 + $0x40] sm:$0xf]
  %v449 = vld [vmem:[#allocation3 + $0x48] sm:$0xf]
  %vm450 = vcmask 293888
  %v452 = vsel %vm450, %v439, 0
  %vm454 = vcmask 1043456
  %v456 = vsel %vm454, %v448, 0
  %v459 = vsel %vm454, %v449, 0
  %461 = vmatprep.subr.mxu0 %v441
  %462 = vmatpush1.msra.mxu0 %v440
  %463 = vmatprep.subr.mxu0 %v443
  %464 = vmatpush1.msra.mxu0 %v442
  %465 = vmatprep.subr.mxu0 %v445
  %466 = vmatpush1.msra.mxu0 %v444
  %467 = vmatprep.subr.mxu0 %v447
  %468 = vmatpush1.msra.mxu0 %v446
  %469 = vmatprep.subr.mxu0 %v459
  %470 = vmatpush1.msra.mxu0 %v456
  %471 = vmatprep.subr.mxu0 0.0
  %472 = vmatpush1.msra.mxu0 0.0
  %473 = vmatprep.subr.mxu0 0.0
  %474 = vmatpush1.msra.mxu0 0.0
  %475 = vmatprep.subr.mxu0 0.0
  %476 = vmatpush1.msra.mxu0 0.0
  %477 = vmatprep.subr.mxu0 0.0
  %478 = vmatpush1.msra.mxu0 0.0
  %479 = vmatprep.subr.mxu0 0.0
  %480 = vmatpush1.msra.mxu0 0.0
  %481 = vmatprep.subr.mxu0 0.0
  %482 = vmatpush1.msra.mxu0 0.0
  %483 = vmatprep.subr.mxu0 0.0
  %484 = vmatpush1.msra.mxu0 0.0
  %485 = vmatprep.subr.mxu0 0.0
  %486 = vmatpush1.msra.mxu0 0.0
  %487 = vmatprep.subr.mxu0 0.0
  %488 = vmatpush1.msra.mxu0 0.0
  %489 = vmatprep.subr.mxu0 0.0
  %490 = vmatpush1.msra.mxu0 0.0
  %491 = vmatprep.subr.mxu0 0.0
  %492 = vmatpush1.msra.mxu0 0.0
  %493 = vmatprep.subr.mxu0 0.0
  %494 = vmatpush1.msra.mxu0 0.0
  %495 = vmatprep.subr.mxu0 0.0
  %496 = vmatpush1.msra.mxu0 0.0
  %497 = vmatprep.subr.mxu0 0.0
  %498 = vmatpush1.msra.mxu0 0.0
  %499 = vmatprep.subr.mxu0 0.0
  %500 = vmatpush1.msra.mxu0 0.0
  %501 = vmatprep.subr.mxu0 0.0
  %502 = vmatpush1.msra.mxu0 0.0
  %503 = vmatprep.subr.mxu0 0.0
  %504 = vmatpush1.msra.mxu0 0.0
  %505 = vmatprep.subr.mxu0 0.0
  %506 = vmatpush1.msra.mxu0 0.0
  %507 = vmatprep.subr.mxu0 0.0
  %508 = vmatpush1.msra.mxu0 0.0
  %509 = vmatprep.subr.mxu0 0.0
  %510 = vmatpush1.msra.mxu0 0.0
  %511 = vmatprep.subr.mxu0 0.0
  %512 = vmatpush1.msra.mxu0 0.0
  %513 = vmatprep.subr.mxu0 0.0
  %514 = vmatpush1.msra.mxu0 0.0
  %515 = vmatprep.subr.mxu0 0.0
  %516 = vmatpush1.msra.mxu0 0.0
  %517 = vmatprep.subr.mxu0 0.0
  %518 = vmatpush1.msra.mxu0 0.0
  %519 = vmatprep.subr.mxu0 0.0
  %520 = vmatpush1.msra.mxu0 0.0
  %521 = vmatprep.subr.mxu0 0.0
  %522 = vmatpush1.msra.mxu0 0.0
  %523 = vmatprep.subr.mxu0 0.0
  %524 = vmatpush1.msra.mxu0 0.0
  %525 = vmatprep.mubr.f32.mxu0 0.0
  %526 = vmatmul.mubr.f32.gmra.mrb[0].mxu0 %v452
  %v527 = vpop.f32.mrb[0].mxu0
  %v528 = vadd.f32 0.0, %v527
  %v529 = vpop.f32.mrb[0].mxu0
  %v530 = vadd.f32 0.0, %v529
  %531 = vdwg.mxu0
  %s532 = scalar_lea.vmem [#allocation3], 80
  %v533 = vld [vmem:[%s532] sm:$0xff]
  %v534 = vld [vmem:[%s532 + $0x8] sm:$0xff]
  %v535 = vld [vmem:[%s532 + $0x10] sm:$0xff]
  %v536 = vld [vmem:[%s532 + $0x18] sm:$0xff]
  %v537 = vld [vmem:[%s532 + $0x20] sm:$0xff]
  %v538 = vld [vmem:[%s532 + $0x28] sm:$0xff]
  %v539 = vld [vmem:[%s532 + $0x30] sm:$0xff]
  %v540 = vld [vmem:[%s532 + $0x38] sm:$0xff]
  %v541 = vld [vmem:[%s532 + $0x40] sm:$0xf]
  %v542 = vld [vmem:[%s532 + $0x48] sm:$0xf]
  %v544 = vsel %vm454, %v541, 0
  %v547 = vsel %vm454, %v542, 0
  %549 = vmatprep.subr.mxu0 %v534
  %550 = vmatpush1.msra.mxu0 %v533
  %551 = vmatprep.subr.mxu0 %v536
  %552 = vmatpush1.msra.mxu0 %v535
  %553 = vmatprep.subr.mxu0 %v538
  %554 = vmatpush1.msra.mxu0 %v537
  %555 = vmatprep.subr.mxu0 %v540
  %556 = vmatpush1.msra.mxu0 %v539
  %557 = vmatprep.subr.mxu0 %v547
  %558 = vmatpush1.msra.mxu0 %v544
  %559 = vmatprep.subr.mxu0 0.0
  %560 = vmatpush1.msra.mxu0 0.0
  %561 = vmatprep.subr.mxu0 0.0
  %562 = vmatpush1.msra.mxu0 0.0
  %563 = vmatprep.subr.mxu0 0.0
  %564 = vmatpush1.msra.mxu0 0.0
  %565 = vmatprep.subr.mxu0 0.0
  %566 = vmatpush1.msra.mxu0 0.0
  %567 = vmatprep.subr.mxu0 0.0
  %568 = vmatpush1.msra.mxu0 0.0
  %569 = vmatprep.subr.mxu0 0.0
  %570 = vmatpush1.msra.mxu0 0.0
  %571 = vmatprep.subr.mxu0 0.0
  %572 = vmatpush1.msra.mxu0 0.0
  %573 = vmatprep.subr.mxu0 0.0
  %574 = vmatpush1.msra.mxu0 0.0
  %575 = vmatprep.subr.mxu0 0.0
  %576 = vmatpush1.msra.mxu0 0.0
  %577 = vmatprep.subr.mxu0 0.0
  %578 = vmatpush1.msra.mxu0 0.0
  %579 = vmatprep.subr.mxu0 0.0
  %580 = vmatpush1.msra.mxu0 0.0
  %581 = vmatprep.subr.mxu0 0.0
  %582 = vmatpush1.msra.mxu0 0.0
  %583 = vmatprep.subr.mxu0 0.0
  %584 = vmatpush1.msra.mxu0 0.0
  %585 = vmatprep.subr.mxu0 0.0
  %586 = vmatpush1.msra.mxu0 0.0
  %587 = vmatprep.subr.mxu0 0.0
  %588 = vmatpush1.msra.mxu0 0.0
  %589 = vmatprep.subr.mxu0 0.0
  %590 = vmatpush1.msra.mxu0 0.0
  %591 = vmatprep.subr.mxu0 0.0
  %592 = vmatpush1.msra.mxu0 0.0
  %593 = vmatprep.subr.mxu0 0.0
  %594 = vmatpush1.msra.mxu0 0.0
  %595 = vmatprep.subr.mxu0 0.0
  %596 = vmatpush1.msra.mxu0 0.0
  %597 = vmatprep.subr.mxu0 0.0
  %598 = vmatpush1.msra.mxu0 0.0
  %599 = vmatprep.subr.mxu0 0.0
  %600 = vmatpush1.msra.mxu0 0.0
  %601 = vmatprep.subr.mxu0 0.0
  %602 = vmatpush1.msra.mxu0 0.0
  %603 = vmatprep.subr.mxu0 0.0
  %604 = vmatpush1.msra.mxu0 0.0
  %605 = vmatprep.subr.mxu0 0.0
  %606 = vmatpush1.msra.mxu0 0.0
  %607 = vmatprep.subr.mxu0 0.0
  %608 = vmatpush1.msra.mxu0 0.0
  %609 = vmatprep.subr.mxu0 0.0
  %610 = vmatpush1.msra.mxu0 0.0
  %611 = vmatprep.subr.mxu0 0.0
  %612 = vmatpush1.msra.mxu0 0.0
  %613 = vmatprep.mubr.f32.mxu0 0.0
  %614 = vmatmul.mubr.f32.gmra.mrb[0].mxu0 %v452
  %v615 = vpop.f32.mrb[0].mxu0
  %v616 = vadd.f32 0.0, %v615
  %v617 = vpop.f32.mrb[0].mxu0
  %v618 = vadd.f32 0.0, %v617
  %619 = vdwg.mxu0
  %v620 = vsel %vm454, %v528, 0.0
  %v621 = vsel %vm454, %v530, 0.0
  %v622 = vadd.f32 %v620, %v621
  %623 = vadd.xlane.f32.xlu0 %v622
  %v624 = vpop.xlane.xlu0 %623
  %v625 = vsel %vm454, %v616, 0.0
  %v626 = vsel %vm454, %v618, 0.0
  %v627 = vadd.f32 %v625, %v626
  %628 = vadd.xlane.f32.xlu0 %v627
  %v629 = vpop.xlane.xlu0 %628
  %v630 = vsel %vm454, %v624, 0.0
  %v631 = vsel %vm454, %v629, 0.0
  %v632 = vadd.f32 %v630, %v631
  %v633 = vmul.f32 %v528, %v528
  %v634 = vmul.f32 %v530, %v530
  %v635 = vmul.f32 %v616, %v616
  %v636 = vmul.f32 %v618, %v618
  %v637 = vsel %vm454, %v633, 0.0
  %v638 = vsel %vm454, %v634, 0.0
  %v639 = vadd.f32 %v637, %v638
  %640 = vadd.xlane.f32.xlu0 %v639
  %v641 = vpop.xlane.xlu0 %640
  %v642 = vsel %vm454, %v635, 0.0
  %v643 = vsel %vm454, %v636, 0.0
  %v644 = vadd.f32 %v642, %v643
  %645 = vadd.xlane.f32.xlu0 %v644
  %v646 = vpop.xlane.xlu0 %645
  %v647 = vsel %vm454, %v641, 0.0
  %v648 = vsel %vm454, %v646, 0.0
  %v649 = vadd.f32 %v647, %v648
  %v650 = vrcp.pop 512.0
  %v651 = vmul.f32 %v632, %v650
  %v652 = vmul.f32 %v649, %v650
  %v653 = vmul.f32 %v651, %v651
  %v654 = vsub.f32 %v652, %v653
  %v655 = vld [vmem:[%s2] sm:$0xf]
  %v656 = vadd.f32 %v654, 1e-05
  %v657 = vrsqrt.pop %v656
  %v658 = vmul.f32 %v655, %v657
  %v659 = vld [vmem:[%s3] sm:$0xf]
  %v660 = vmul.f32 %v651, %v658
  %v661 = vsub.f32 %v659, %v660
  %663 = vset.pattern.permute.xlu0 0
  %664 = vperm.xlu0 %663, %v658
  %v665 = vpop.permute.xlu0 %664
  %v667 = vmul.f32 %v528, %v665
  %v668 = vmul.f32 %v530, %v665
  %v669 = vmul.f32 %v616, %v665
  %v670 = vmul.f32 %v618, %v665
  %672 = vset.pattern.permute.xlu0 0
  %673 = vperm.xlu0 %672, %v661
  %v674 = vpop.permute.xlu0 %673
  %v676 = vadd.f32 %v667, %v674
  %v677 = vadd.f32 %v668, %v674
  %v678 = vadd.f32 %v669, %v674
  %v679 = vadd.f32 %v670, %v674
  %v680 = vmax.f32 %v676, 0.0
  %v681 = vmax.f32 %v677, 0.0
  %v682 = vmax.f32 %v678, 0.0
  %v683 = vmax.f32 %v679, 0.0
  %v688 = vcombine.low %v680, %v681
  %v689 = vcombine.low %v682, %v683
  %690 = vrot.lane.b32.xlu0 %v688, 17
  %v691 = vpop.permute.xlu0 %690
  %692 = vrot.lane.b32.xlu0 %v689, 17
  %v693 = vpop.permute.xlu0 %692
  %v694 = vrot.slane %v691, 4
  %v695 = vrot.slane %v693, 4
  %v696 = vsel %vm73, %v694, %v691
  %v697 = vsel %vm73, %v695, %v693
  %702 = vst.msk [vmem:[#allocation2] sm:$0xff] %vm82, %v696
  %703 = vst.msk [vmem:[#allocation2 + $0x8] sm:$0xf] %vm57, %v694
  %704 = vst.msk [vmem:[#allocation2 + $0xc] sm:$0xff] %vm82, %v697
  %705 = vst.msk [vmem:[#allocation2 + $0x14] sm:$0xf] %vm57, %v695
  %v706 = vld [vmem:[#allocation2] sm:$0xff]
  %v707 = vld [vmem:[#allocation2 + $0xc] sm:$0xff]
  %v710 = vcombine.high %v706, %v706
  %v711 = vcombine.high %v707, %v707
  %v714 = vsel %vm91, %v706, 0.0
  %v715 = vsel %vm92, %v710, 0.0
  %v716 = vsel %vm91, %v707, 0.0
  %v717 = vsel %vm92, %v711, 0.0
  %718 = vst [vmem:[#allocation3] sm:$0xf] %v714
  %719 = vst [vmem:[#allocation3 + $0x8] sm:$0xf] %v715
  %720 = vst [vmem:[#allocation3 + $0x50] sm:$0xf] %v716
  %721 = vst [vmem:[#allocation3 + $0x58] sm:$0xf] %v717
  %v722 = vld [vmem:[#allocation2] sm:$0xff]
  %v723 = vld [vmem:[#allocation2 + $0x8] sm:$0xf]
  %v724 = vld [vmem:[#allocation2 + $0xc] sm:$0xff]
  %v725 = vld [vmem:[#allocation2 + $0x14] sm:$0xf]
  %v730 = vcombine.low %v722, %v722
  %v731 = vcombine.low %v723, %v723
  %v732 = vcombine.low %v724, %v724
  %v733 = vcombine.low %v725, %v725
  %734 = vrot.lane.b32.xlu0 %v730, 127
  %v735 = vpop.permute.xlu0 %734
  %736 = vrot.lane.b32.xlu0 %v722, 127
  %v737 = vpop.permute.xlu0 %736
  %738 = vrot.lane.b32.xlu0 %v731, 127
  %v739 = vpop.permute.xlu0 %738
  %740 = vrot.lane.b32.xlu0 %v732, 127
  %v741 = vpop.permute.xlu0 %740
  %742 = vrot.lane.b32.xlu0 %v724, 127
  %v743 = vpop.permute.xlu0 %742
  %744 = vrot.lane.b32.xlu0 %v733, 127
  %v745 = vpop.permute.xlu0 %744
  %v746 = vsel %vm131, %v735, %v737
  %v747 = vsel %vm131, %v737, %v739
  %v748 = vsel %vm131, %v741, %v743
  %v749 = vsel %vm131, %v743, %v745
  %754 = vst [vmem:[#allocation3] sm:$0xf0] %v746
  %755 = vst [vmem:[#allocation3 + $0x8] sm:$0xf0] %v747
  %756 = vst [vmem:[#allocation3 + $0x50] sm:$0xf0] %v748
  %757 = vst [vmem:[#allocation3 + $0x58] sm:$0xf0] %v749
  %v758 = vld [vmem:[#allocation2] sm:$0xff]
  %v759 = vld [vmem:[#allocation2 + $0x8] sm:$0xf]
  %v760 = vld [vmem:[#allocation2 + $0xc] sm:$0xff]
  %v761 = vld [vmem:[#allocation2 + $0x14] sm:$0xf]
  %v766 = vcombine.high %v758, %v758
  %v767 = vcombine.high %v760, %v760
  %768 = vrot.lane.b32.xlu0 %v758, 126
  %v769 = vpop.permute.xlu0 %768
  %770 = vrot.lane.b32.xlu0 %v766, 126
  %v771 = vpop.permute.xlu0 %770
  %772 = vrot.lane.b32.xlu0 %v759, 126
  %v773 = vpop.permute.xlu0 %772
  %774 = vrot.lane.b32.xlu0 %v760, 126
  %v775 = vpop.permute.xlu0 %774
  %776 = vrot.lane.b32.xlu0 %v767, 126
  %v777 = vpop.permute.xlu0 %776
  %778 = vrot.lane.b32.xlu0 %v761, 126
  %v779 = vpop.permute.xlu0 %778
  %v780 = vsel %vm170, %v769, %v771
  %v781 = vsel %vm170, %v771, %v773
  %v782 = vsel %vm170, %v775, %v777
  %v783 = vsel %vm170, %v777, %v779
  %v788 = vsel %vm150, %v780, 0.0
  %v789 = vsel %vm151, %v781, 0.0
  %v790 = vsel %vm150, %v782, 0.0
  %v791 = vsel %vm151, %v783, 0.0
  %792 = vst [vmem:[#allocation3 + $0x10] sm:$0xf] %v788
  %793 = vst [vmem:[#allocation3 + $0x18] sm:$0xf] %v789
  %794 = vst [vmem:[#allocation3 + $0x60] sm:$0xf] %v790
  %795 = vst [vmem:[#allocation3 + $0x68] sm:$0xf] %v791
  %v796 = vld [vmem:[#allocation2] sm:$0xff]
  %v797 = vld [vmem:[#allocation2 + $0x8] sm:$0xf]
  %v798 = vld [vmem:[#allocation2 + $0xc] sm:$0xff]
  %v799 = vld [vmem:[#allocation2 + $0x14] sm:$0xf]
  %v804 = vcombine.high %v796, %v796
  %v805 = vcombine.high %v798, %v798
  %806 = vrot.lane.b32.xlu0 %v796, 112
  %v807 = vpop.permute.xlu0 %806
  %808 = vrot.lane.b32.xlu0 %v804, 112
  %v809 = vpop.permute.xlu0 %808
  %810 = vrot.lane.b32.xlu0 %v797, 112
  %v811 = vpop.permute.xlu0 %810
  %812 = vrot.lane.b32.xlu0 %v798, 112
  %v813 = vpop.permute.xlu0 %812
  %814 = vrot.lane.b32.xlu0 %v805, 112
  %v815 = vpop.permute.xlu0 %814
  %816 = vrot.lane.b32.xlu0 %v799, 112
  %v817 = vpop.permute.xlu0 %816
  %v818 = vsel %vm209, %v807, %v809
  %v819 = vsel %vm209, %v809, %v811
  %v820 = vsel %vm209, %v813, %v815
  %v821 = vsel %vm209, %v815, %v817
  %v826 = vsel %vm91, %v818, 0.0
  %v827 = vsel %vm92, %v819, 0.0
  %v828 = vsel %vm91, %v820, 0.0
  %v829 = vsel %vm92, %v821, 0.0
  %v834 = vrot.slane %v826, 4
  %v835 = vrot.slane %v827, 4
  %v836 = vrot.slane %v828, 4
  %v837 = vrot.slane %v829, 4
  %842 = vst [vmem:[#allocation3 + $0x10] sm:$0xf0] %v834
  %843 = vst [vmem:[#allocation3 + $0x18] sm:$0xf0] %v835
  %844 = vst [vmem:[#allocation3 + $0x60] sm:$0xf0] %v836
  %845 = vst [vmem:[#allocation3 + $0x68] sm:$0xf0] %v837
  %v846 = vld [vmem:[#allocation2] sm:$0xff]
  %v847 = vld [vmem:[#allocation2 + $0x8] sm:$0xf]
  %v848 = vld [vmem:[#allocation2 + $0xc] sm:$0xff]
  %v849 = vld [vmem:[#allocation2 + $0x14] sm:$0xf]
  %v854 = vcombine.high %v846, %v846
  %v855 = vcombine.high %v848, %v848
  %856 = vrot.lane.b32.xlu0 %v846, 111
  %v857 = vpop.permute.xlu0 %856
  %858 = vrot.lane.b32.xlu0 %v854, 111
  %v859 = vpop.permute.xlu0 %858
  %860 = vrot.lane.b32.xlu0 %v847, 111
  %v861 = vpop.permute.xlu0 %860
  %862 = vrot.lane.b32.xlu0 %v848, 111
  %v863 = vpop.permute.xlu0 %862
  %864 = vrot.lane.b32.xlu0 %v855, 111
  %v865 = vpop.permute.xlu0 %864
  %866 = vrot.lane.b32.xlu0 %v849, 111
  %v867 = vpop.permute.xlu0 %866
  %v868 = vsel %vm260, %v857, %v859
  %v869 = vsel %vm260, %v859, %v861
  %v870 = vsel %vm260, %v863, %v865
  %v871 = vsel %vm260, %v865, %v867
  %876 = vst [vmem:[#allocation3 + $0x20] sm:$0xf] %v868
  %877 = vst [vmem:[#allocation3 + $0x28] sm:$0xf] %v869
  %878 = vst [vmem:[#allocation3 + $0x70] sm:$0xf] %v870
  %879 = vst [vmem:[#allocation3 + $0x78] sm:$0xf] %v871
  %v880 = vld [vmem:[#allocation2] sm:$0xff]
  %v881 = vld [vmem:[#allocation2 + $0x8] sm:$0xf]
  %v882 = vld [vmem:[#allocation2 + $0xc] sm:$0xff]
  %v883 = vld [vmem:[#allocation2 + $0x14] sm:$0xf]
  %v888 = vcombine.high %v880, %v880
  %v889 = vcombine.high %v882, %v882
  %890 = vrot.lane.b32.xlu0 %v880, 110
  %v891 = vpop.permute.xlu0 %890
  %892 = vrot.lane.b32.xlu0 %v888, 110
  %v893 = vpop.permute.xlu0 %892
  %894 = vrot.lane.b32.xlu0 %v881, 110
  %v895 = vpop.permute.xlu0 %894
  %896 = vrot.lane.b32.xlu0 %v882, 110
  %v897 = vpop.permute.xlu0 %896
  %898 = vrot.lane.b32.xlu0 %v889, 110
  %v899 = vpop.permute.xlu0 %898
  %900 = vrot.lane.b32.xlu0 %v883, 110
  %v901 = vpop.permute.xlu0 %900
  %v902 = vsel %vm295, %v891, %v893
  %v903 = vsel %vm295, %v893, %v895
  %v904 = vsel %vm295, %v897, %v899
  %v905 = vsel %vm295, %v899, %v901
  %v910 = vsel %vm150, %v902, 0.0
  %v911 = vsel %vm151, %v903, 0.0
  %v912 = vsel %vm150, %v904, 0.0
  %v913 = vsel %vm151, %v905, 0.0
  %v918 = vrot.slane %v910, 4
  %v919 = vrot.slane %v911, 4
  %v920 = vrot.slane %v912, 4
  %v921 = vrot.slane %v913, 4
  %926 = vst [vmem:[#allocation3 + $0x20] sm:$0xf0] %v918
  %927 = vst [vmem:[#allocation3 + $0x28] sm:$0xf0] %v919
  %928 = vst [vmem:[#allocation3 + $0x70] sm:$0xf0] %v920
  %929 = vst [vmem:[#allocation3 + $0x78] sm:$0xf0] %v921
  %v930 = vld [vmem:[#allocation2] sm:$0xff]
  %v931 = vld [vmem:[#allocation2 + $0x8] sm:$0xf]
  %v932 = vld [vmem:[#allocation2 + $0xc] sm:$0xff]
  %v933 = vld [vmem:[#allocation2 + $0x14] sm:$0xf]
  %v938 = vcombine.high %v930, %v930
  %v939 = vcombine.high %v932, %v932
  %940 = vrot.lane.b32.xlu0 %v930, 96
  %v941 = vpop.permute.xlu0 %940
  %942 = vrot.lane.b32.xlu0 %v938, 96
  %v943 = vpop.permute.xlu0 %942
  %944 = vrot.lane.b32.xlu0 %v931, 96
  %v945 = vpop.permute.xlu0 %944
  %946 = vrot.lane.b32.xlu0 %v932, 96
  %v947 = vpop.permute.xlu0 %946
  %948 = vrot.lane.b32.xlu0 %v939, 96
  %v949 = vpop.permute.xlu0 %948
  %950 = vrot.lane.b32.xlu0 %v933, 96
  %v951 = vpop.permute.xlu0 %950
  %v952 = vsel %vm346, %v941, %v943
  %v953 = vsel %vm346, %v943, %v945
  %v954 = vsel %vm346, %v947, %v949
  %v955 = vsel %vm346, %v949, %v951
  %v960 = vsel %vm91, %v952, 0.0
  %v961 = vsel %vm92, %v953, 0.0
  %v962 = vsel %vm91, %v954, 0.0
  %v963 = vsel %vm92, %v955, 0.0
  %964 = vst [vmem:[#allocation3 + $0x30] sm:$0xf] %v960
  %965 = vst [vmem:[#allocation3 + $0x38] sm:$0xf] %v961
  %966 = vst [vmem:[#allocation3 + $0x80] sm:$0xf] %v962
  %967 = vst [vmem:[#allocation3 + $0x88] sm:$0xf] %v963
  %v968 = vld [vmem:[#allocation2] sm:$0xff]
  %v969 = vld [vmem:[#allocation2 + $0x8] sm:$0xf]
  %v970 = vld [vmem:[#allocation2 + $0xc] sm:$0xff]
  %v971 = vld [vmem:[#allocation2 + $0x14] sm:$0xf]
  %v976 = vcombine.low %v968, %v968
  %v977 = vcombine.low %v969, %v969
  %v978 = vcombine.low %v970, %v970
  %v979 = vcombine.low %v971, %v971
  %980 = vrot.lane.b32.xlu0 %v976, 95
  %v981 = vpop.permute.xlu0 %980
  %982 = vrot.lane.b32.xlu0 %v968, 95
  %v983 = vpop.permute.xlu0 %982
  %984 = vrot.lane.b32.xlu0 %v977, 95
  %v985 = vpop.permute.xlu0 %984
  %986 = vrot.lane.b32.xlu0 %v978, 95
  %v987 = vpop.permute.xlu0 %986
  %988 = vrot.lane.b32.xlu0 %v970, 95
  %v989 = vpop.permute.xlu0 %988
  %990 = vrot.lane.b32.xlu0 %v979, 95
  %v991 = vpop.permute.xlu0 %990
  %v992 = vsel %vm387, %v981, %v983
  %v993 = vsel %vm387, %v983, %v985
  %v994 = vsel %vm387, %v987, %v989
  %v995 = vsel %vm387, %v989, %v991
  %1000 = vst [vmem:[#allocation3 + $0x30] sm:$0xf0] %v992
  %1001 = vst [vmem:[#allocation3 + $0x38] sm:$0xf0] %v993
  %1002 = vst [vmem:[#allocation3 + $0x80] sm:$0xf0] %v994
  %1003 = vst [vmem:[#allocation3 + $0x88] sm:$0xf0] %v995
  %v1004 = vld [vmem:[#allocation2] sm:$0xff]
  %v1005 = vld [vmem:[#allocation2 + $0x8] sm:$0xf]
  %v1006 = vld [vmem:[#allocation2 + $0xc] sm:$0xff]
  %v1007 = vld [vmem:[#allocation2 + $0x14] sm:$0xf]
  %v1012 = vcombine.high %v1004, %v1004
  %v1013 = vcombine.high %v1006, %v1006
  %1014 = vrot.lane.b32.xlu0 %v1004, 94
  %v1015 = vpop.permute.xlu0 %1014
  %1016 = vrot.lane.b32.xlu0 %v1012, 94
  %v1017 = vpop.permute.xlu0 %1016
  %1018 = vrot.lane.b32.xlu0 %v1005, 94
  %v1019 = vpop.permute.xlu0 %1018
  %1020 = vrot.lane.b32.xlu0 %v1006, 94
  %v1021 = vpop.permute.xlu0 %1020
  %1022 = vrot.lane.b32.xlu0 %v1013, 94
  %v1023 = vpop.permute.xlu0 %1022
  %1024 = vrot.lane.b32.xlu0 %v1007, 94
  %v1025 = vpop.permute.xlu0 %1024
  %v1026 = vsel %vm422, %v1015, %v1017
  %v1027 = vsel %vm422, %v1017, %v1019
  %v1028 = vsel %vm422, %v1021, %v1023
  %v1029 = vsel %vm422, %v1023, %v1025
  %v1034 = vsel %vm150, %v1026, 0.0
  %v1035 = vsel %vm151, %v1027, 0.0
  %v1036 = vsel %vm150, %v1028, 0.0
  %v1037 = vsel %vm151, %v1029, 0.0
  %1038 = vst [vmem:[#allocation3 + $0x40] sm:$0xf] %v1034
  %1039 = vst [vmem:[#allocation3 + $0x48] sm:$0xf] %v1035
  %1040 = vst [vmem:[#allocation3 + $0x90] sm:$0xf] %v1036
  %1041 = vst [vmem:[#allocation3 + $0x98] sm:$0xf] %v1037
  %v1042 = vld [vmem:[%s4] sm:$0xf]
  %v1043 = vld [vmem:[#allocation3] sm:$0xff]
  %v1044 = vld [vmem:[#allocation3 + $0x8] sm:$0xff]
  %v1045 = vld [vmem:[#allocation3 + $0x10] sm:$0xff]
  %v1046 = vld [vmem:[#allocation3 + $0x18] sm:$0xff]
  %v1047 = vld [vmem:[#allocation3 + $0x20] sm:$0xff]
  %v1048 = vld [vmem:[#allocation3 + $0x28] sm:$0xff]
  %v1049 = vld [vmem:[#allocation3 + $0x30] sm:$0xff]
  %v1050 = vld [vmem:[#allocation3 + $0x38] sm:$0xff]
  %v1051 = vld [vmem:[#allocation3 + $0x40] sm:$0xf]
  %v1052 = vld [vmem:[#allocation3 + $0x48] sm:$0xf]
  %v1054 = vsel %vm450, %v1042, 0
  %v1057 = vsel %vm454, %v1051, 0
  %v1060 = vsel %vm454, %v1052, 0
  %1062 = vmatprep.subr.mxu0 %v1044
  %1063 = vmatpush1.msra.mxu0 %v1043
  %1064 = vmatprep.subr.mxu0 %v1046
  %1065 = vmatpush1.msra.mxu0 %v1045
  %1066 = vmatprep.subr.mxu0 %v1048
  %1067 = vmatpush1.msra.mxu0 %v1047
  %1068 = vmatprep.subr.mxu0 %v1050
  %1069 = vmatpush1.msra.mxu0 %v1049
  %1070 = vmatprep.subr.mxu0 %v1060
  %1071 = vmatpush1.msra.mxu0 %v1057
  %1072 = vmatprep.subr.mxu0 0.0
  %1073 = vmatpush1.msra.mxu0 0.0
  %1074 = vmatprep.subr.mxu0 0.0
  %1075 = vmatpush1.msra.mxu0 0.0
  %1076 = vmatprep.subr.mxu0 0.0
  %1077 = vmatpush1.msra.mxu0 0.0
  %1078 = vmatprep.subr.mxu0 0.0
  %1079 = vmatpush1.msra.mxu0 0.0
  %1080 = vmatprep.subr.mxu0 0.0
  %1081 = vmatpush1.msra.mxu0 0.0
  %1082 = vmatprep.subr.mxu0 0.0
  %1083 = vmatpush1.msra.mxu0 0.0
  %1084 = vmatprep.subr.mxu0 0.0
  %1085 = vmatpush1.msra.mxu0 0.0
  %1086 = vmatprep.subr.mxu0 0.0
  %1087 = vmatpush1.msra.mxu0 0.0
  %1088 = vmatprep.subr.mxu0 0.0
  %1089 = vmatpush1.msra.mxu0 0.0
  %1090 = vmatprep.subr.mxu0 0.0
  %1091 = vmatpush1.msra.mxu0 0.0
  %1092 = vmatprep.subr.mxu0 0.0
  %1093 = vmatpush1.msra.mxu0 0.0
  %1094 = vmatprep.subr.mxu0 0.0
  %1095 = vmatpush1.msra.mxu0 0.0
  %1096 = vmatprep.subr.mxu0 0.0
  %1097 = vmatpush1.msra.mxu0 0.0
  %1098 = vmatprep.subr.mxu0 0.0
  %1099 = vmatpush1.msra.mxu0 0.0
  %1100 = vmatprep.subr.mxu0 0.0
  %1101 = vmatpush1.msra.mxu0 0.0
  %1102 = vmatprep.subr.mxu0 0.0
  %1103 = vmatpush1.msra.mxu0 0.0
  %1104 = vmatprep.subr.mxu0 0.0
  %1105 = vmatpush1.msra.mxu0 0.0
  %1106 = vmatprep.subr.mxu0 0.0
  %1107 = vmatpush1.msra.mxu0 0.0
  %1108 = vmatprep.subr.mxu0 0.0
  %1109 = vmatpush1.msra.mxu0 0.0
  %1110 = vmatprep.subr.mxu0 0.0
  %1111 = vmatpush1.msra.mxu0 0.0
  %1112 = vmatprep.subr.mxu0 0.0
  %1113 = vmatpush1.msra.mxu0 0.0
  %1114 = vmatprep.subr.mxu0 0.0
  %1115 = vmatpush1.msra.mxu0 0.0
  %1116 = vmatprep.subr.mxu0 0.0
  %1117 = vmatpush1.msra.mxu0 0.0
  %1118 = vmatprep.subr.mxu0 0.0
  %1119 = vmatpush1.msra.mxu0 0.0
  %1120 = vmatprep.subr.mxu0 0.0
  %1121 = vmatpush1.msra.mxu0 0.0
  %1122 = vmatprep.subr.mxu0 0.0
  %1123 = vmatpush1.msra.mxu0 0.0
  %1124 = vmatprep.subr.mxu0 0.0
  %1125 = vmatpush1.msra.mxu0 0.0
  %1126 = vmatprep.mubr.f32.mxu0 0.0
  %1127 = vmatmul.mubr.f32.gmra.mrb[0].mxu0 %v1054
  %v1128 = vpop.f32.mrb[0].mxu0
  %v1129 = vadd.f32 0.0, %v1128
  %v1130 = vpop.f32.mrb[0].mxu0
  %v1131 = vadd.f32 0.0, %v1130
  %1132 = vdwg.mxu0
  %v1133 = vld [vmem:[%s532] sm:$0xff]
  %v1134 = vld [vmem:[%s532 + $0x8] sm:$0xff]
  %v1135 = vld [vmem:[%s532 + $0x10] sm:$0xff]
  %v1136 = vld [vmem:[%s532 + $0x18] sm:$0xff]
  %v1137 = vld [vmem:[%s532 + $0x20] sm:$0xff]
  %v1138 = vld [vmem:[%s532 + $0x28] sm:$0xff]
  %v1139 = vld [vmem:[%s532 + $0x30] sm:$0xff]
  %v1140 = vld [vmem:[%s532 + $0x38] sm:$0xff]
  %v1141 = vld [vmem:[%s532 + $0x40] sm:$0xf]
  %v1142 = vld [vmem:[%s532 + $0x48] sm:$0xf]
  %v1144 = vsel %vm454, %v1141, 0
  %v1147 = vsel %vm454, %v1142, 0
  %1149 = vmatprep.subr.mxu0 %v1134
  %1150 = vmatpush1.msra.mxu0 %v1133
  %1151 = vmatprep.subr.mxu0 %v1136
  %1152 = vmatpush1.msra.mxu0 %v1135
  %1153 = vmatprep.subr.mxu0 %v1138
  %1154 = vmatpush1.msra.mxu0 %v1137
  %1155 = vmatprep.subr.mxu0 %v1140
  %1156 = vmatpush1.msra.mxu0 %v1139
  %1157 = vmatprep.subr.mxu0 %v1147
  %1158 = vmatpush1.msra.mxu0 %v1144
  %1159 = vmatprep.subr.mxu0 0.0
  %1160 = vmatpush1.msra.mxu0 0.0
  %1161 = vmatprep.subr.mxu0 0.0
  %1162 = vmatpush1.msra.mxu0 0.0
  %1163 = vmatprep.subr.mxu0 0.0
  %1164 = vmatpush1.msra.mxu0 0.0
  %1165 = vmatprep.subr.mxu0 0.0
  %1166 = vmatpush1.msra.mxu0 0.0
  %1167 = vmatprep.subr.mxu0 0.0
  %1168 = vmatpush1.msra.mxu0 0.0
  %1169 = vmatprep.subr.mxu0 0.0
  %1170 = vmatpush1.msra.mxu0 0.0
  %1171 = vmatprep.subr.mxu0 0.0
  %1172 = vmatpush1.msra.mxu0 0.0
  %1173 = vmatprep.subr.mxu0 0.0
  %1174 = vmatpush1.msra.mxu0 0.0
  %1175 = vmatprep.subr.mxu0 0.0
  %1176 = vmatpush1.msra.mxu0 0.0
  %1177 = vmatprep.subr.mxu0 0.0
  %1178 = vmatpush1.msra.mxu0 0.0
  %1179 = vmatprep.subr.mxu0 0.0
  %1180 = vmatpush1.msra.mxu0 0.0
  %1181 = vmatprep.subr.mxu0 0.0
  %1182 = vmatpush1.msra.mxu0 0.0
  %1183 = vmatprep.subr.mxu0 0.0
  %1184 = vmatpush1.msra.mxu0 0.0
  %1185 = vmatprep.subr.mxu0 0.0
  %1186 = vmatpush1.msra.mxu0 0.0
  %1187 = vmatprep.subr.mxu0 0.0
  %1188 = vmatpush1.msra.mxu0 0.0
  %1189 = vmatprep.subr.mxu0 0.0
  %1190 = vmatpush1.msra.mxu0 0.0
  %1191 = vmatprep.subr.mxu0 0.0
  %1192 = vmatpush1.msra.mxu0 0.0
  %1193 = vmatprep.subr.mxu0 0.0
  %1194 = vmatpush1.msra.mxu0 0.0
  %1195 = vmatprep.subr.mxu0 0.0
  %1196 = vmatpush1.msra.mxu0 0.0
  %1197 = vmatprep.subr.mxu0 0.0
  %1198 = vmatpush1.msra.mxu0 0.0
  %1199 = vmatprep.subr.mxu0 0.0
  %1200 = vmatpush1.msra.mxu0 0.0
  %1201 = vmatprep.subr.mxu0 0.0
  %1202 = vmatpush1.msra.mxu0 0.0
  %1203 = vmatprep.subr.mxu0 0.0
  %1204 = vmatpush1.msra.mxu0 0.0
  %1205 = vmatprep.subr.mxu0 0.0
  %1206 = vmatpush1.msra.mxu0 0.0
  %1207 = vmatprep.subr.mxu0 0.0
  %1208 = vmatpush1.msra.mxu0 0.0
  %1209 = vmatprep.subr.mxu0 0.0
  %1210 = vmatpush1.msra.mxu0 0.0
  %1211 = vmatprep.subr.mxu0 0.0
  %1212 = vmatpush1.msra.mxu0 0.0
  %1213 = vmatprep.mubr.f32.mxu0 0.0
  %1214 = vmatmul.mubr.f32.gmra.mrb[0].mxu0 %v1054
  %v1215 = vpop.f32.mrb[0].mxu0
  %v1216 = vadd.f32 0.0, %v1215
  %v1217 = vpop.f32.mrb[0].mxu0
  %v1218 = vadd.f32 0.0, %v1217
  %1219 = vdwg.mxu0
  %v1220 = vsel %vm454, %v1129, 0.0
  %v1221 = vsel %vm454, %v1131, 0.0
  %v1222 = vadd.f32 %v1220, %v1221
  %1223 = vadd.xlane.f32.xlu0 %v1222
  %v1224 = vpop.xlane.xlu0 %1223
  %v1225 = vsel %vm454, %v1216, 0.0
  %v1226 = vsel %vm454, %v1218, 0.0
  %v1227 = vadd.f32 %v1225, %v1226
  %1228 = vadd.xlane.f32.xlu0 %v1227
  %v1229 = vpop.xlane.xlu0 %1228
  %v1230 = vsel %vm454, %v1224, 0.0
  %v1231 = vsel %vm454, %v1229, 0.0
  %v1232 = vadd.f32 %v1230, %v1231
  %v1233 = vmul.f32 %v1129, %v1129
  %v1234 = vmul.f32 %v1131, %v1131
  %v1235 = vmul.f32 %v1216, %v1216
  %v1236 = vmul.f32 %v1218, %v1218
  %v1237 = vsel %vm454, %v1233, 0.0
  %v1238 = vsel %vm454, %v1234, 0.0
  %v1239 = vadd.f32 %v1237, %v1238
  %1240 = vadd.xlane.f32.xlu0 %v1239
  %v1241 = vpop.xlane.xlu0 %1240
  %v1242 = vsel %vm454, %v1235, 0.0
  %v1243 = vsel %vm454, %v1236, 0.0
  %v1244 = vadd.f32 %v1242, %v1243
  %1245 = vadd.xlane.f32.xlu0 %v1244
  %v1246 = vpop.xlane.xlu0 %1245
  %v1247 = vsel %vm454, %v1241, 0.0
  %v1248 = vsel %vm454, %v1246, 0.0
  %v1249 = vadd.f32 %v1247, %v1248
  %v1250 = vmul.f32 %v1232, %v650
  %v1251 = vmul.f32 %v1249, %v650
  %v1252 = vmul.f32 %v1250, %v1250
  %v1253 = vsub.f32 %v1251, %v1252
  %v1254 = vld [vmem:[%s5] sm:$0xf]
  %v1255 = vadd.f32 %v1253, 1e-05
  %v1256 = vrsqrt.pop %v1255
  %v1257 = vmul.f32 %v1254, %v1256
  %v1258 = vld [vmem:[%s6] sm:$0xf]
  %v1259 = vmul.f32 %v1250, %v1257
  %v1260 = vsub.f32 %v1258, %v1259
  %1262 = vset.pattern.permute.xlu0 0
  %1263 = vperm.xlu0 %1262, %v1257
  %v1264 = vpop.permute.xlu0 %1263
  %v1266 = vmul.f32 %v1129, %v1264
  %v1267 = vmul.f32 %v1131, %v1264
  %v1268 = vmul.f32 %v1216, %v1264
  %v1269 = vmul.f32 %v1218, %v1264
  %1271 = vset.pattern.permute.xlu0 0
  %1272 = vperm.xlu0 %1271, %v1260
  %v1273 = vpop.permute.xlu0 %1272
  %v1275 = vadd.f32 %v1266, %v1273
  %v1276 = vadd.f32 %v1267, %v1273
  %v1277 = vadd.f32 %v1268, %v1273
  %v1278 = vadd.f32 %v1269, %v1273
  %v1279 = vcombine.high %v63, %v63
  %v1280 = vcombine.high %v64, %v64
  %v1283 = vadd.f32 %v1275, %v63
  %v1284 = vadd.f32 %v1276, %v1279
  %v1285 = vadd.f32 %v1277, %v64
  %v1286 = vadd.f32 %v1278, %v1280
  %v1287 = vmax.f32 %v1283, 0.0
  %v1288 = vmax.f32 %v1284, 0.0
  %v1289 = vmax.f32 %v1285, 0.0
  %v1290 = vmax.f32 %v1286, 0.0
  %v1295 = vcombine.low %v1287, %v1288
  %v1296 = vcombine.low %v1289, %v1290
  %1299 = vst [vmem:[%s7] sm:$0xff] %v1295
  %1300 = vst [vmem:[%s7 + $0x8] sm:$0xff] %v1296
  // Predicated region
  $region30: #{basic_block.1} parent=0 // pred_check
    _
  $region31: #{basic_block.1} parent=0 // pred_check_branch
    %1302 = sbr.rel (0) target = $region33
  $region32: #{basic_block.1} parent=0 // pred_region
    _
  $region33: #{basic_block.1} parent=0 // pred_fallthru
    _
  // Predicated region
  $region34: #{basic_block.1} parent=0 // pred_check
    _
  $region35: #{basic_block.1} parent=0 // pred_check_branch
    %1304 = sbr.rel (0) target = $region37
  $region36: #{basic_block.1} parent=0 // pred_region
    _
  $region37: #{basic_block.1} parent=0 // pred_fallthru
    _

</llo_original>
